<compile_context>
chip_gen: v7x
topology: tpu7x:2x2x1
jax: 0.10.0
libtpu: 0.0.40
codegen_flags: <defaults>
</compile_context>

<pallas_src>
import numpy as np
import jax
import jax.numpy as jnp
from jax import lax
from jax.experimental import pallas as pl
from jax.experimental.pallas import tpu as pltpu

# ----------------------------- config (small) --------------------------------
COORD_DIM = 3                 # module's PE assumes 3-D coords
Z_DIM = 16                    # small (module default 100)
HIDDEN_DIM = 32               # small (module default 256)
NUM_FILM = 7                  # fixed by the module (7 FiLMLayer_Gauss)
NUM_COND = NUM_FILM + 1       # +1 for color_layer_sine's cond layer
NUM_XYZ_FREQ = 10
NUM_DIR_FREQ = 4
D_XYZ = 3 + 6 * NUM_XYZ_FREQ  # 63
D_DIR = 3 + 6 * NUM_DIR_FREQ  # 27
SIGMA = 0.2
GRID_SCALE = 2.0 / 0.24       # UniformBoxWarp(0.24)
BATCH = 2
NUM_POINTS = 8

# Set to jnp.bfloat16 at production sizes (H=256, thousands of points): bf16 MXU
# operands are native on v5e/v6e/v7x and halve weight DMA/VMEM.  Keep f32 here so
# the tight allclose check against the f32 reference holds at toy sizes.
MATMUL_DTYPE = jnp.float32


def _gauss(v):
    # gauss_act(v, SIGMA) = exp(-0.5 * (v / SIGMA)^2)
    return jnp.exp((-0.5 / (SIGMA * SIGMA)) * (v * v))


def _pe_matrix(degree, scale):
    """(3, 3+6*degree) channel-selection-with-frequency matrix in PE column order.

    Column j of PE(scale * x, degree) is x[j % 3] * F[j % 3, j] pushed through
    identity / sin / cos, so the in-kernel frequency expansion is three exact
    lane-broadcast multiplies (no concat, no extra MXU op).  Frequencies are
    powers of two, so the pre-activations match the reference bit-for-bit.
    """
    d = 3 + 6 * degree
    f = np.zeros((3, d), np.float32)
    s = np.float32(scale)
    for ch in range(3):
        f[ch, ch] = s
        for i in range(degree):
            w = s * np.float32(2.0 ** i)
            f[ch, 3 + 3 * i + ch] = w                      # sin block
            f[ch, 3 + 3 * degree + 3 * i + ch] = w         # cos block
    return jnp.asarray(f)


# ------------------------------ fused kernel ----------------------------------
def mlp_gauss_kernel(ycond_ref,                        # SMEM (B, 2*NUM_COND)
                     coords_ref, dirs_ref,             # (1, T, 3)
                     fxyz_ref, fdir_ref,               # (3, 63) / (3, 27)
                     wenc_ref, benc_ref,               # (63, H), (1, H)
                     wstack_ref, bstack_ref,           # (7, H, H), (7, 1, H)
                     wcd_ref, wcomb_ref, bcomb_ref,    # (27, H), (H, H+1), (1, H+1)
                     wrgb_ref, brgb_ref,               # (H, 4), (1, 4)
                     out_ref):                         # (1, T, 4)
    H = wstack_ref.shape[-1]
    b = pl.program_id(0)
    wdt = wstack_ref.dtype

    def pos_enc(v, f_ref):
        # pre[:, j] = v[:, j % 3] * freq(j)  (exact: products by 0 / powers of 2)
        pre = (v[:, 0:1] * f_ref[0:1, :]
               + v[:, 1:2] * f_ref[1:2, :]
               + v[:, 2:3] * f_ref[2:3, :])
        d = pre.shape[-1]
        n_sin = 3 + (d - 3) // 2
        col = lax.broadcasted_iota(jnp.int32, pre.shape, 1)
        # identity | sin | cos per column  ==  PE(...) with no lane concat
        return jnp.where(col < 3, pre,
                         jnp.where(col < n_sin, jnp.sin(pre), jnp.cos(pre)))

    # --- encoding_xyz: gauss(PE(gridwarp(coords)) @ W_enc + b_enc) ------------
    pe_x = pos_enc(coords_ref[0], fxyz_ref)                           # (T, 63)
    x = _gauss(jnp.dot(pe_x.astype(wdt), wenc_ref[...],
                       preferred_element_type=jnp.float32) + benc_ref[...])

    # --- 7 FiLM-Gauss layers; fori_loop bounds live ranges across the chain ---
    def film(i, x):
        lin = jnp.dot(x.astype(wdt), wstack_ref[i],
                      preferred_element_type=jnp.float32) + bstack_ref[i]
        a = ycond_ref[b, 2 * i]          # SMEM scalar-operand path
        bb = ycond_ref[b, 2 * i + 1]
        return _gauss(lin) * a + bb

    x = lax.fori_loop(0, NUM_FILM, film, x)

    # --- sigma head merged into the x-part of the color-FiLM matmul -----------
    # t = x @ [Wcs[27:], Wfin] + [bcs, bfin]  -> (T, H+1)
    t = jnp.dot(x.astype(wdt), wcomb_ref[...],
                preferred_element_type=jnp.float32) + bcomb_ref[...]
    sigma = t[:, H:H + 1]                                             # (T, 1)

    # --- color FiLM layer: PE(ray_dirs) built in-kernel ------------------------
    pe_d = pos_enc(dirs_ref[0], fdir_ref)                             # (T, 27)
    lin_c = jnp.dot(pe_d.astype(wdt), wcd_ref[...],
                    preferred_element_type=jnp.float32) + t[:, :H]
    a = ycond_ref[b, 2 * NUM_FILM]
    bb = ycond_ref[b, 2 * NUM_FILM + 1]
    c = _gauss(lin_c) * a + bb

    # --- color linear (zero-padded to 4 lanes) + sigmoid, single dense store --
    rgb4 = jnp.dot(c.astype(wdt), wrgb_ref[...],
                   preferred_element_type=jnp.float32) + brgb_ref[...]   # (T, 4)
    col = lax.broadcasted_iota(jnp.int32, rgb4.shape, 1)
    out_ref[0] = jnp.where(col < 3, jax.nn.sigmoid(rgb4), sigma).astype(out_ref.dtype)


# --------------------------- one-time param re-layout --------------------------
def prepare_kernel_params(p, matmul_dtype=MATMUL_DTYPE):
    """Hoisted out of the forward path — call once after init / checkpoint load."""
    H = p["w_enc"].shape[1]
    zd = p["wcond"].shape[1]
    cd = matmul_dtype
    return {
        "w_enc": p["w_enc"].astype(cd),
        "b_enc": p["b_enc"],                                          # biases stay f32
        "wstack": p["wstack"].astype(cd),
        "bstack3": p["bstack"][:, None, :],                           # (7, 1, H)
        "wcond_fused": jnp.transpose(p["wcond"], (1, 0, 2)).reshape(zd, 2 * NUM_COND),
        "bcond_fused": p["bcond"].reshape(1, 2 * NUM_COND),
        "wcd": p["wcs"][:D_DIR].astype(cd),                           # (27, H)
        "wcomb": jnp.concatenate([p["wcs"][D_DIR:], p["wfin"]], axis=1).astype(cd),
        "bcomb": jnp.concatenate([p["bcs"], p["bfin"]], axis=1),      # (1, H+1)
        "wrgb4": jnp.concatenate([p["wrgb"], jnp.zeros((H, 1), jnp.float32)],
                                 axis=1).astype(cd),                  # (H, 4)
        "brgb4": jnp.concatenate([p["brgb"], jnp.zeros((1, 1), jnp.float32)], axis=1),
        # PE expansion matrices (kept f32 for phase accuracy of high frequencies)
        "f_xyz": _pe_matrix(NUM_XYZ_FREQ, GRID_SCALE),                # (3, 63)
        "f_dir": _pe_matrix(NUM_DIR_FREQ, 1.0),                       # (3, 27)
    }


# --------------------------------- wrapper -------------------------------------
def mlp_gauss_forward(kp, coords, z, ray_dirs, *, tile_n=1024):
    B, N, _ = coords.shape
    H = kp["w_enc"].shape[1]
    TILE_N = N if N <= tile_n else tile_n
    # TODO(synk): pad N up to a TILE_N multiple for ragged production point counts.
    assert N % TILE_N == 0, "N must be a multiple of the row tile"
    n_tiles = N // TILE_N

    # All 8 FiLM cond layers as one tiny (B, zd) @ (zd, 16) matmul done by XLA;
    # the result is fed to the kernel through SMEM (scalar-operand path in-kernel).
    y_cond = (z @ kp["wcond_fused"] + kp["bcond_fused"]).astype(jnp.float32)

    pt = lambda f: pl.BlockSpec((1, TILE_N, f), lambda b, n: (b, n, 0))
    w2 = lambda s: pl.BlockSpec(s, lambda b, n: (0, 0))        # grid-invariant 2-D weight
    w3 = lambda s: pl.BlockSpec(s, lambda b, n: (0, 0, 0))     # grid-invariant 3-D weight
    # TODO(synk): on v7x (64 MiB VMEM) single-buffer the grid-invariant weight specs
    # (pipeline_mode=pl.Buffered(1)), use ~1024-row tiles, and set vmem_limit_bytes.

    return pl.pallas_call(
        mlp_gauss_kernel,
        out_shape=jax.ShapeDtypeStruct((B, N, 4), jnp.float32),
        grid_spec=pl.GridSpec(
            grid=(B, n_tiles),
            in_specs=[
                pl.BlockSpec(memory_space=pltpu.MemorySpace.SMEM),    # y_cond (B, 16)
                pt(COORD_DIM),                                        # coords
                pt(COORD_DIM),                                        # ray_dirs
                w2((COORD_DIM, D_XYZ)),                               # f_xyz
                w2((COORD_DIM, D_DIR)),                               # f_dir
                w2((D_XYZ, H)), w2((1, H)),                           # w_enc, b_enc
                w3((NUM_FILM, H, H)), w3((NUM_FILM, 1, H)),           # wstack, bstack
                w2((D_DIR, H)),                                       # wcd
                w2((H, H + 1)), w2((1, H + 1)),                       # wcomb, bcomb
                w2((H, 4)), w2((1, 4)),                               # wrgb, brgb (padded)
            ],
            out_specs=pl.BlockSpec((1, TILE_N, 4), lambda b, n: (b, n, 0)),
        ),
        compiler_params=pltpu.CompilerParams(
            dimension_semantics=("parallel", "parallel")),
    )(y_cond, coords, ray_dirs,
      kp["f_xyz"], kp["f_dir"],
      kp["w_enc"], kp["b_enc"],
      kp["wstack"], kp["bstack3"],
      kp["wcd"], kp["wcomb"], kp["bcomb"],
      kp["wrgb4"], kp["brgb4"])


# ------------------------------ param init ------------------------------------
def init_params(key, z_dim=Z_DIM, hidden_dim=HIDDEN_DIM):
    H = hidden_dim
    ks = jax.random.split(key, 24)
    ki = iter(range(24))

    def linear(k, fan_in, fan_out):
        k1, k2 = jax.random.split(k)
        bound = 1.0 / jnp.sqrt(fan_in)
        w = jax.random.uniform(k1, (fan_in, fan_out), jnp.float32, -bound, bound)
        b = jax.random.uniform(k2, (1, fan_out), jnp.float32, -bound, bound)
        return w, b

    p = {}
    p["w_enc"], p["b_enc"] = linear(ks[next(ki)], D_XYZ, H)

    ws, bs, wcs_, bcs_ = [], [], [], []
    for _ in range(NUM_FILM):
        w, b = linear(ks[next(ki)], H, H)
        ws.append(w); bs.append(b[0])
        wc, bc = linear(ks[next(ki)], z_dim, 2)
        wcs_.append(wc); bcs_.append(bc[0])
    wc, bc = linear(ks[next(ki)], z_dim, 2)        # color_layer_sine cond
    wcs_.append(wc); bcs_.append(bc[0])

    p["wstack"] = jnp.stack(ws)                    # (7, H, H)
    p["bstack"] = jnp.stack(bs)                    # (7, H)
    p["wcond"] = jnp.stack(wcs_)                   # (8, z_dim, 2)
    p["bcond"] = jnp.stack(bcs_)                   # (8, 2)

    p["wcs"], p["bcs"] = linear(ks[next(ki)], D_DIR + H, H)   # color_layer_sine
    p["wfin"], p["bfin"] = linear(ks[next(ki)], H, 1)          # final_layer
    p["wrgb"], p["brgb"] = linear(ks[next(ki)], H, 3)          # color_layer_linear
    return p


# ------------------------------ pure-JAX reference ----------------------------
def positional_encoding(x, degree):
    y = jnp.concatenate([(2.0 ** i) * x for i in range(degree)], axis=-1)
    return jnp.concatenate([x, jnp.sin(y), jnp.cos(y)], axis=-1)


def reference_forward(params, coords, z, ray_dirs):
    def gauss(v):
        return jnp.exp(-0.5 * jnp.square(v / SIGMA))

    pe_xyz = positional_encoding(coords * GRID_SCALE, NUM_XYZ_FREQ)
    pe_dir = positional_encoding(ray_dirs, NUM_DIR_FREQ)

    x = gauss(pe_xyz @ params["w_enc"] + params["b_enc"])
    for i in range(NUM_FILM):
        lin = x @ params["wstack"][i] + params["bstack"][i]
        y = z @ params["wcond"][i] + params["bcond"][i]
        a = y[:, 0][:, None, None]
        b = y[:, 1][:, None, None]
        x = gauss(lin) * a + b

    sigma = x @ params["wfin"] + params["bfin"]

    cin = jnp.concatenate([pe_dir, x], axis=-1)
    lin_c = cin @ params["wcs"] + params["bcs"]
    y = z @ params["wcond"][NUM_FILM] + params["bcond"][NUM_FILM]
    a = y[:, 0][:, None, None]
    b = y[:, 1][:, None, None]
    c = gauss(lin_c) * a + b

    rgb = jax.nn.sigmoid(c @ params["wrgb"] + params["brgb"])
    return jnp.concatenate([rgb, sigma], axis=-1)


# ----------------------------------- main --------------------------------------
if __name__ == "__main__":
    key = jax.random.PRNGKey(0)
    kpar, kc, kz, kr = jax.random.split(key, 4)

    params = init_params(kpar)
    coords = jax.random.normal(kc, (BATCH, NUM_POINTS, COORD_DIM), jnp.float32)
    z = jax.random.normal(kz, (BATCH, Z_DIM), jnp.float32)
    ray_dirs = jax.random.normal(kr, (BATCH, NUM_POINTS, COORD_DIM), jnp.float32)

    kparams = prepare_kernel_params(params)        # one-time re-layout (hoisted)
    fwd = jax.jit(mlp_gauss_forward)

    out = jax.block_until_ready(fwd(kparams, coords, z, ray_dirs))
    ref = jax.block_until_ready(reference_forward(params, coords, z, ray_dirs))

    assert out.shape == (BATCH, NUM_POINTS, 4)
    # Tolerance covers the only expected divergence: in-kernel (Mosaic) sin/cos vs
    # XLA sin/cos on the large top-frequency PE arguments (~2^9 * gridscale * |x|).
    assert jnp.allclose(out, ref, rtol=5e-3, atol=5e-3), "mismatch vs JAX reference"

    print("KERNEL_OK")
</pallas_src>

<mosaic_0001>
module attributes {stable_mosaic.version = 11 : i64} {
  func.func @mlp_gauss_kernel(%arg0: i32, %arg1: i32, %arg2: memref<2x16xf32, #tpu.memory_space<smem>>, %arg3: memref<1x8x3xf32, #tpu.memory_space<vmem>>, %arg4: memref<1x8x3xf32, #tpu.memory_space<vmem>>, %arg5: memref<3x63xf32, #tpu.memory_space<vmem>>, %arg6: memref<3x27xf32, #tpu.memory_space<vmem>>, %arg7: memref<63x32xf32, #tpu.memory_space<vmem>>, %arg8: memref<1x32xf32, #tpu.memory_space<vmem>>, %arg9: memref<7x32x32xf32, #tpu.memory_space<vmem>>, %arg10: memref<7x1x32xf32, #tpu.memory_space<vmem>>, %arg11: memref<27x32xf32, #tpu.memory_space<vmem>>, %arg12: memref<32x33xf32, #tpu.memory_space<vmem>>, %arg13: memref<1x33xf32, #tpu.memory_space<vmem>>, %arg14: memref<32x4xf32, #tpu.memory_space<vmem>>, %arg15: memref<1x4xf32, #tpu.memory_space<vmem>>, %arg16: memref<1x8x4xf32, #tpu.memory_space<vmem>>) attributes {dimension_semantics = [#tpu.dimension_semantics<parallel>, #tpu.dimension_semantics<parallel>], iteration_bounds = array<i64: 2, 1>, scalar_prefetch = 0 : i64, scratch_operands = 0 : i64, tpu.core_type = #tpu.core_type<tc>, window_params = [{transform_indices = @transform_0, window_bounds = array<i64: 2, 16>}, {transform_indices = @transform_1, window_bounds = array<i64: 1, 8, 3>}, {transform_indices = @transform_2, window_bounds = array<i64: 1, 8, 3>}, {pipeline_mode = #tpu.pipeline_mode<synchronous>, transform_indices = @transform_3, window_bounds = array<i64: 3, 63>}, {pipeline_mode = #tpu.pipeline_mode<synchronous>, transform_indices = @transform_4, window_bounds = array<i64: 3, 27>}, {pipeline_mode = #tpu.pipeline_mode<synchronous>, transform_indices = @transform_5, window_bounds = array<i64: 63, 32>}, {pipeline_mode = #tpu.pipeline_mode<synchronous>, transform_indices = @transform_6, window_bounds = array<i64: 1, 32>}, {pipeline_mode = #tpu.pipeline_mode<synchronous>, transform_indices = @transform_7, window_bounds = array<i64: 7, 32, 32>}, {pipeline_mode = #tpu.pipeline_mode<synchronous>, transform_indices = @transform_8, window_bounds = array<i64: 7, 1, 32>}, {pipeline_mode = #tpu.pipeline_mode<synchronous>, transform_indices = @transform_9, window_bounds = array<i64: 27, 32>}, {pipeline_mode = #tpu.pipeline_mode<synchronous>, transform_indices = @transform_10, window_bounds = array<i64: 32, 33>}, {pipeline_mode = #tpu.pipeline_mode<synchronous>, transform_indices = @transform_11, window_bounds = array<i64: 1, 33>}, {pipeline_mode = #tpu.pipeline_mode<synchronous>, transform_indices = @transform_12, window_bounds = array<i64: 32, 4>}, {pipeline_mode = #tpu.pipeline_mode<synchronous>, transform_indices = @transform_13, window_bounds = array<i64: 1, 4>}, {transform_indices = @transform_14, window_bounds = array<i64: 1, 8, 4>}]} {
    %c0 = arith.constant 0 : index
    %c0_0 = arith.constant 0 : index
    %c0_1 = arith.constant 0 : index
    %0 = vector.load %arg3[%c0, %c0_0, %c0_1] : memref<1x8x3xf32, #tpu.memory_space<vmem>>, vector<1x8x3xf32>
    %1 = vector.shape_cast %0 : vector<1x8x3xf32> to vector<8x3xf32>
    %2 = vector.extract_strided_slice %1 {offsets = [0, 0], sizes = [8, 1], strides = [1, 1]} : vector<8x3xf32> to vector<8x1xf32>
    %c0_2 = arith.constant 0 : index
    %c0_3 = arith.constant 0 : index
    %3 = vector.load %arg5[%c0_2, %c0_3] : memref<3x63xf32, #tpu.memory_space<vmem>>, vector<1x63xf32>
    %4 = vector.broadcast %2 : vector<8x1xf32> to vector<8x63xf32>
    %5 = vector.broadcast %3 : vector<1x63xf32> to vector<8x63xf32>
    %6 = arith.mulf %4, %5 : vector<8x63xf32>
    %7 = vector.extract_strided_slice %1 {offsets = [0, 1], sizes = [8, 1], strides = [1, 1]} : vector<8x3xf32> to vector<8x1xf32>
    %c1 = arith.constant 1 : index
    %c0_4 = arith.constant 0 : index
    %8 = vector.load %arg5[%c1, %c0_4] : memref<3x63xf32, #tpu.memory_space<vmem>>, vector<1x63xf32>
    %9 = vector.broadcast %7 : vector<8x1xf32> to vector<8x63xf32>
    %10 = vector.broadcast %8 : vector<1x63xf32> to vector<8x63xf32>
    %11 = arith.mulf %9, %10 : vector<8x63xf32>
    %12 = arith.addf %6, %11 : vector<8x63xf32>
    %13 = vector.extract_strided_slice %1 {offsets = [0, 2], sizes = [8, 1], strides = [1, 1]} : vector<8x3xf32> to vector<8x1xf32>
    %c2 = arith.constant 2 : index
    %c0_5 = arith.constant 0 : index
    %14 = vector.load %arg5[%c2, %c0_5] : memref<3x63xf32, #tpu.memory_space<vmem>>, vector<1x63xf32>
    %15 = vector.broadcast %13 : vector<8x1xf32> to vector<8x63xf32>
    %16 = vector.broadcast %14 : vector<1x63xf32> to vector<8x63xf32>
    %17 = arith.mulf %15, %16 : vector<8x63xf32>
    %18 = arith.addf %12, %17 : vector<8x63xf32>
    %19 = tpu.iota {dimensions = array<i32: 1>} : vector<8x63xi32>
    %c3_i32 = arith.constant 3 : i32
    %20 = vector.broadcast %c3_i32 : i32 to vector<8x63xi32>
    %21 = arith.cmpi slt, %19, %20 : vector<8x63xi32>
    %c33_i32 = arith.constant 33 : i32
    %22 = vector.broadcast %c33_i32 : i32 to vector<8x63xi32>
    %23 = arith.cmpi slt, %19, %22 : vector<8x63xi32>
    %24 = math.sin %18 : vector<8x63xf32>
    %25 = math.cos %18 : vector<8x63xf32>
    %26 = arith.select %23, %24, %25 : vector<8x63xi1>, vector<8x63xf32>
    %27 = arith.select %21, %18, %26 : vector<8x63xi1>, vector<8x63xf32>
    %c0_6 = arith.constant 0 : index
    %c0_7 = arith.constant 0 : index
    %28 = vector.load %arg7[%c0_6, %c0_7] : memref<63x32xf32, #tpu.memory_space<vmem>>, vector<63x32xf32>
    %cst = arith.constant dense<0.000000e+00> : vector<8x32xf32>
    %29 = tpu.matmul %27, %28, %cst {dimension_numbers = #tpu.dot_dimension_numbers<[1], [0], [0], [1], [0, 0, 1, 1], [], []>} : vector<8x63xf32>, vector<63x32xf32>, vector<8x32xf32> -> vector<8x32xf32>
    %c0_8 = arith.constant 0 : index
    %c0_9 = arith.constant 0 : index
    %30 = vector.load %arg8[%c0_8, %c0_9] : memref<1x32xf32, #tpu.memory_space<vmem>>, vector<1x32xf32>
    %31 = vector.broadcast %30 : vector<1x32xf32> to vector<8x32xf32>
    %32 = arith.addf %29, %31 : vector<8x32xf32>
    %33 = arith.mulf %32, %32 : vector<8x32xf32>
    %cst_10 = arith.constant -1.250000e+01 : f32
    %34 = vector.broadcast %cst_10 : f32 to vector<8x32xf32>
    %35 = arith.mulf %34, %33 : vector<8x32xf32>
    %36 = math.exp %35 : vector<8x32xf32>
    %c0_i32 = arith.constant 0 : i32
    %c7_i32 = arith.constant 7 : i32
    %37 = arith.addi %c0_i32, %c7_i32 : i32
    %c1_i32 = arith.constant 1 : i32
    %38 = scf.for %arg17 = %c0_i32 to %37 step %c1_i32 iter_args(%arg18 = %36) -> (vector<8x32xf32>)  : i32 {
      %108 = arith.index_cast %arg17 : i32 to index
      %c0_41 = arith.constant 0 : index
      %c0_42 = arith.constant 0 : index
      %109 = vector.load %arg9[%108, %c0_41, %c0_42] : memref<7x32x32xf32, #tpu.memory_space<vmem>>, vector<1x32x32xf32>
      %110 = vector.shape_cast %109 : vector<1x32x32xf32> to vector<32x32xf32>
      %cst_43 = arith.constant dense<0.000000e+00> : vector<8x32xf32>
      %111 = tpu.matmul %arg18, %110, %cst_43 {dimension_numbers = #tpu.dot_dimension_numbers<[1], [0], [0], [1], [0, 0, 1, 1], [], []>} : vector<8x32xf32>, vector<32x32xf32>, vector<8x32xf32> -> vector<8x32xf32>
      %112 = arith.index_cast %arg17 : i32 to index
      %c0_44 = arith.constant 0 : index
      %c0_45 = arith.constant 0 : index
      %113 = vector.load %arg10[%112, %c0_44, %c0_45] : memref<7x1x32xf32, #tpu.memory_space<vmem>>, vector<1x1x32xf32>
      %114 = vector.shape_cast %113 : vector<1x1x32xf32> to vector<1x32xf32>
      %115 = vector.broadcast %114 : vector<1x32xf32> to vector<8x32xf32>
      %116 = arith.addf %111, %115 : vector<8x32xf32>
      %c2_i32 = arith.constant 2 : i32
      %117 = arith.muli %c2_i32, %arg17 : i32
      %118 = arith.index_cast %arg0 : i32 to index
      %119 = arith.index_cast %117 : i32 to index
      %120 = memref.load %arg2[%118, %119] : memref<2x16xf32, #tpu.memory_space<smem>>
      %c2_i32_46 = arith.constant 2 : i32
      %121 = arith.muli %c2_i32_46, %arg17 : i32
      %c1_i32_47 = arith.constant 1 : i32
      %122 = arith.addi %121, %c1_i32_47 : i32
      %123 = arith.index_cast %arg0 : i32 to index
      %124 = arith.index_cast %122 : i32 to index
      %125 = memref.load %arg2[%123, %124] : memref<2x16xf32, #tpu.memory_space<smem>>
      %126 = arith.mulf %116, %116 : vector<8x32xf32>
      %cst_48 = arith.constant -1.250000e+01 : f32
      %127 = vector.broadcast %cst_48 : f32 to vector<8x32xf32>
      %128 = arith.mulf %127, %126 : vector<8x32xf32>
      %129 = math.exp %128 : vector<8x32xf32>
      %130 = vector.broadcast %120 : f32 to vector<8x32xf32>
      %131 = arith.mulf %129, %130 : vector<8x32xf32>
      %132 = vector.broadcast %125 : f32 to vector<8x32xf32>
      %133 = arith.addf %131, %132 : vector<8x32xf32>
      scf.yield %133 : vector<8x32xf32>
    }
    %c7_i32_11 = arith.constant 7 : i32
    %c0_12 = arith.constant 0 : index
    %c0_13 = arith.constant 0 : index
    %39 = vector.load %arg12[%c0_12, %c0_13] : memref<32x33xf32, #tpu.memory_space<vmem>>, vector<32x33xf32>
    %cst_14 = arith.constant dense<0.000000e+00> : vector<8x33xf32>
    %40 = tpu.matmul %38, %39, %cst_14 {dimension_numbers = #tpu.dot_dimension_numbers<[1], [0], [0], [1], [0, 0, 1, 1], [], []>} : vector<8x32xf32>, vector<32x33xf32>, vector<8x33xf32> -> vector<8x33xf32>
    %c0_15 = arith.constant 0 : index
    %c0_16 = arith.constant 0 : index
    %41 = vector.load %arg13[%c0_15, %c0_16] : memref<1x33xf32, #tpu.memory_space<vmem>>, vector<1x33xf32>
    %42 = vector.broadcast %41 : vector<1x33xf32> to vector<8x33xf32>
    %43 = arith.addf %40, %42 : vector<8x33xf32>
    %44 = vector.extract_strided_slice %43 {offsets = [0, 32], sizes = [8, 1], strides = [1, 1]} : vector<8x33xf32> to vector<8x1xf32>
    %c0_17 = arith.constant 0 : index
    %c0_18 = arith.constant 0 : index
    %c0_19 = arith.constant 0 : index
    %45 = vector.load %arg4[%c0_17, %c0_18, %c0_19] : memref<1x8x3xf32, #tpu.memory_space<vmem>>, vector<1x8x3xf32>
    %46 = vector.shape_cast %45 : vector<1x8x3xf32> to vector<8x3xf32>
    %47 = vector.extract_strided_slice %46 {offsets = [0, 0], sizes = [8, 1], strides = [1, 1]} : vector<8x3xf32> to vector<8x1xf32>
    %c0_20 = arith.constant 0 : index
    %c0_21 = arith.constant 0 : index
    %48 = vector.load %arg6[%c0_20, %c0_21] : memref<3x27xf32, #tpu.memory_space<vmem>>, vector<1x27xf32>
    %49 = vector.broadcast %47 : vector<8x1xf32> to vector<8x27xf32>
    %50 = vector.broadcast %48 : vector<1x27xf32> to vector<8x27xf32>
    %51 = arith.mulf %49, %50 : vector<8x27xf32>
    %52 = vector.extract_strided_slice %46 {offsets = [0, 1], sizes = [8, 1], strides = [1, 1]} : vector<8x3xf32> to vector<8x1xf32>
    %c1_22 = arith.constant 1 : index
    %c0_23 = arith.constant 0 : index
    %53 = vector.load %arg6[%c1_22, %c0_23] : memref<3x27xf32, #tpu.memory_space<vmem>>, vector<1x27xf32>
    %54 = vector.broadcast %52 : vector<8x1xf32> to vector<8x27xf32>
    %55 = vector.broadcast %53 : vector<1x27xf32> to vector<8x27xf32>
    %56 = arith.mulf %54, %55 : vector<8x27xf32>
    %57 = arith.addf %51, %56 : vector<8x27xf32>
    %58 = vector.extract_strided_slice %46 {offsets = [0, 2], sizes = [8, 1], strides = [1, 1]} : vector<8x3xf32> to vector<8x1xf32>
    %c2_24 = arith.constant 2 : index
    %c0_25 = arith.constant 0 : index
    %59 = vector.load %arg6[%c2_24, %c0_25] : memref<3x27xf32, #tpu.memory_space<vmem>>, vector<1x27xf32>
    %60 = vector.broadcast %58 : vector<8x1xf32> to vector<8x27xf32>
    %61 = vector.broadcast %59 : vector<1x27xf32> to vector<8x27xf32>
    %62 = arith.mulf %60, %61 : vector<8x27xf32>
    %63 = arith.addf %57, %62 : vector<8x27xf32>
    %64 = tpu.iota {dimensions = array<i32: 1>} : vector<8x27xi32>
    %c3_i32_26 = arith.constant 3 : i32
    %65 = vector.broadcast %c3_i32_26 : i32 to vector<8x27xi32>
    %66 = arith.cmpi slt, %64, %65 : vector<8x27xi32>
    %c15_i32 = arith.constant 15 : i32
    %67 = vector.broadcast %c15_i32 : i32 to vector<8x27xi32>
    %68 = arith.cmpi slt, %64, %67 : vector<8x27xi32>
    %69 = math.sin %63 : vector<8x27xf32>
    %70 = math.cos %63 : vector<8x27xf32>
    %71 = arith.select %68, %69, %70 : vector<8x27xi1>, vector<8x27xf32>
    %72 = arith.select %66, %63, %71 : vector<8x27xi1>, vector<8x27xf32>
    %c0_27 = arith.constant 0 : index
    %c0_28 = arith.constant 0 : index
    %73 = vector.load %arg11[%c0_27, %c0_28] : memref<27x32xf32, #tpu.memory_space<vmem>>, vector<27x32xf32>
    %cst_29 = arith.constant dense<0.000000e+00> : vector<8x32xf32>
    %74 = tpu.matmul %72, %73, %cst_29 {dimension_numbers = #tpu.dot_dimension_numbers<[1], [0], [0], [1], [0, 0, 1, 1], [], []>} : vector<8x27xf32>, vector<27x32xf32>, vector<8x32xf32> -> vector<8x32xf32>
    %75 = vector.extract_strided_slice %43 {offsets = [0, 0], sizes = [8, 32], strides = [1, 1]} : vector<8x33xf32> to vector<8x32xf32>
    %76 = arith.addf %74, %75 : vector<8x32xf32>
    %77 = arith.index_cast %arg0 : i32 to index
    %c14 = arith.constant 14 : index
    %78 = memref.load %arg2[%77, %c14] : memref<2x16xf32, #tpu.memory_space<smem>>
    %79 = arith.index_cast %arg0 : i32 to index
    %c15 = arith.constant 15 : index
    %80 = memref.load %arg2[%79, %c15] : memref<2x16xf32, #tpu.memory_space<smem>>
    %81 = arith.mulf %76, %76 : vector<8x32xf32>
    %cst_30 = arith.constant -1.250000e+01 : f32
    %82 = vector.broadcast %cst_30 : f32 to vector<8x32xf32>
    %83 = arith.mulf %82, %81 : vector<8x32xf32>
    %84 = math.exp %83 : vector<8x32xf32>
    %85 = vector.broadcast %78 : f32 to vector<8x32xf32>
    %86 = arith.mulf %84, %85 : vector<8x32xf32>
    %87 = vector.broadcast %80 : f32 to vector<8x32xf32>
    %88 = arith.addf %86, %87 : vector<8x32xf32>
    %c0_31 = arith.constant 0 : index
    %c0_32 = arith.constant 0 : index
    %89 = vector.load %arg14[%c0_31, %c0_32] : memref<32x4xf32, #tpu.memory_space<vmem>>, vector<32x4xf32>
    %cst_33 = arith.constant dense<0.000000e+00> : vector<8x4xf32>
    %90 = tpu.matmul %88, %89, %cst_33 {dimension_numbers = #tpu.dot_dimension_numbers<[1], [0], [0], [1], [0, 0, 1, 1], [], []>} : vector<8x32xf32>, vector<32x4xf32>, vector<8x4xf32> -> vector<8x4xf32>
    %c0_34 = arith.constant 0 : index
    %c0_35 = arith.constant 0 : index
    %91 = vector.load %arg15[%c0_34, %c0_35] : memref<1x4xf32, #tpu.memory_space<vmem>>, vector<1x4xf32>
    %92 = vector.broadcast %91 : vector<1x4xf32> to vector<8x4xf32>
    %93 = arith.addf %90, %92 : vector<8x4xf32>
    %94 = tpu.iota {dimensions = array<i32: 1>} : vector<8x4xi32>
    %c3_i32_36 = arith.constant 3 : i32
    %95 = vector.broadcast %c3_i32_36 : i32 to vector<8x4xi32>
    %96 = arith.cmpi slt, %94, %95 : vector<8x4xi32>
    %97 = arith.negf %93 : vector<8x4xf32>
    %98 = math.exp %97 : vector<8x4xf32>
    %cst_37 = arith.constant 1.000000e+00 : f32
    %99 = vector.broadcast %cst_37 : f32 to vector<8x4xf32>
    %100 = arith.addf %99, %98 : vector<8x4xf32>
    %101 = arith.divf %99, %100 : vector<8x4xf32>
    %102 = vector.shape_cast %44 : vector<8x1xf32> to vector<8x1xf32>
    %103 = vector.broadcast %102 : vector<8x1xf32> to vector<8x4xf32>
    %104 = arith.select %96, %101, %103 : vector<8x4xi1>, vector<8x4xf32>
    %c0_38 = arith.constant 0 : index
    %c0_39 = arith.constant 0 : index
    %c0_40 = arith.constant 0 : index
    %105 = vector.load %arg16[%c0_38, %c0_39, %c0_40] : memref<1x8x4xf32, #tpu.memory_space<vmem>>, vector<1x8x4xf32>
    %106 = vector.shape_cast %105 : vector<1x8x4xf32> to vector<8x4xf32>
    %107 = vector.shape_cast %104 : vector<8x4xf32> to vector<1x8x4xf32>
    tpu.vector_store %arg16[%c0_38, %c0_39, %c0_40], %107 {strides = array<i32>} : memref<1x8x4xf32, #tpu.memory_space<vmem>>, vector<1x8x4xf32>,
    return
  }
  func.func @transform_0(%arg0: i32, %arg1: i32) -> (i32, i32) {
    %c0_i32 = arith.constant 0 : i32
    %c0_i32_0 = arith.constant 0 : i32
    %c0_i32_1 = arith.constant 0 : i32
    return %c0_i32, %c0_i32_0 : i32, i32
  }
  func.func @transform_1(%arg0: i32, %arg1: i32) -> (i32, i32, i32) {
    %c0_i32 = arith.constant 0 : i32
    %c0_i32_0 = arith.constant 0 : i32
    return %arg0, %arg1, %c0_i32 : i32, i32, i32
  }
  func.func @transform_2(%arg0: i32, %arg1: i32) -> (i32, i32, i32) {
    %c0_i32 = arith.constant 0 : i32
    %c0_i32_0 = arith.constant 0 : i32
    return %arg0, %arg1, %c0_i32 : i32, i32, i32
  }
  func.func @transform_3(%arg0: i32, %arg1: i32) -> (i32, i32) {
    %c0_i32 = arith.constant 0 : i32
    %c0_i32_0 = arith.constant 0 : i32
    %c0_i32_1 = arith.constant 0 : i32
    return %c0_i32, %c0_i32_0 : i32, i32
  }
  func.func @transform_4(%arg0: i32, %arg1: i32) -> (i32, i32) {
    %c0_i32 = arith.constant 0 : i32
    %c0_i32_0 = arith.constant 0 : i32
    %c0_i32_1 = arith.constant 0 : i32
    return %c0_i32, %c0_i32_0 : i32, i32
  }
  func.func @transform_5(%arg0: i32, %arg1: i32) -> (i32, i32) {
    %c0_i32 = arith.constant 0 : i32
    %c0_i32_0 = arith.constant 0 : i32
    %c0_i32_1 = arith.constant 0 : i32
    return %c0_i32, %c0_i32_0 : i32, i32
  }
  func.func @transform_6(%arg0: i32, %arg1: i32) -> (i32, i32) {
    %c0_i32 = arith.constant 0 : i32
    %c0_i32_0 = arith.constant 0 : i32
    %c0_i32_1 = arith.constant 0 : i32
    return %c0_i32, %c0_i32_0 : i32, i32
  }
  func.func @transform_7(%arg0: i32, %arg1: i32) -> (i32, i32, i32) {
    %c0_i32 = arith.constant 0 : i32
    %c0_i32_0 = arith.constant 0 : i32
    %c0_i32_1 = arith.constant 0 : i32
    %c0_i32_2 = arith.constant 0 : i32
    return %c0_i32, %c0_i32_0, %c0_i32_1 : i32, i32, i32
  }
  func.func @transform_8(%arg0: i32, %arg1: i32) -> (i32, i32, i32) {
    %c0_i32 = arith.constant 0 : i32
    %c0_i32_0 = arith.constant 0 : i32
    %c0_i32_1 = arith.constant 0 : i32
    %c0_i32_2 = arith.constant 0 : i32
    return %c0_i32, %c0_i32_0, %c0_i32_1 : i32, i32, i32
  }
  func.func @transform_9(%arg0: i32, %arg1: i32) -> (i32, i32) {
    %c0_i32 = arith.constant 0 : i32
    %c0_i32_0 = arith.constant 0 : i32
    %c0_i32_1 = arith.constant 0 : i32
    return %c0_i32, %c0_i32_0 : i32, i32
  }
  func.func @transform_10(%arg0: i32, %arg1: i32) -> (i32, i32) {
    %c0_i32 = arith.constant 0 : i32
    %c0_i32_0 = arith.constant 0 : i32
    %c0_i32_1 = arith.constant 0 : i32
    return %c0_i32, %c0_i32_0 : i32, i32
  }
  func.func @transform_11(%arg0: i32, %arg1: i32) -> (i32, i32) {
    %c0_i32 = arith.constant 0 : i32
    %c0_i32_0 = arith.constant 0 : i32
    %c0_i32_1 = arith.constant 0 : i32
    return %c0_i32, %c0_i32_0 : i32, i32
  }
  func.func @transform_12(%arg0: i32, %arg1: i32) -> (i32, i32) {
    %c0_i32 = arith.constant 0 : i32
    %c0_i32_0 = arith.constant 0 : i32
    %c0_i32_1 = arith.constant 0 : i32
    return %c0_i32, %c0_i32_0 : i32, i32
  }
  func.func @transform_13(%arg0: i32, %arg1: i32) -> (i32, i32) {
    %c0_i32 = arith.constant 0 : i32
    %c0_i32_0 = arith.constant 0 : i32
    %c0_i32_1 = arith.constant 0 : i32
    return %c0_i32, %c0_i32_0 : i32, i32
  }
  func.func @transform_14(%arg0: i32, %arg1: i32) -> (i32, i32, i32) {
    %c0_i32 = arith.constant 0 : i32
    %c0_i32_0 = arith.constant 0 : i32
    return %arg0, %arg1, %c0_i32 : i32, i32, i32
  }
}

</mosaic_0001>

<llo_original>
// kernel: mlp_gauss_forward.1
$region0: #{mlp_gauss_forward.1}
  #allocation0 [shape = 'u32[]', space=smem, size = 0x4, offset = 0x4, fixed_abs, tag = 'smem constant byte address 0x4 - core index']
  #allocation1 [shape = 'u32[144,128]{1,0:T(1,128)}', space=vmem, size = 0x12000, scoped, tag = 'internal scratch']
  %s0 = inlined_call_operand.vmem [shape: f32[2,16], index: 0, kind: input, shape index: {}]
  %s1 = inlined_call_operand.vmem [shape: f32[2,8,3], index: 1, kind: input, shape index: {}]
  %s2 = inlined_call_operand.vmem [shape: f32[2,8,3], index: 2, kind: input, shape index: {}]
  %s3 = inlined_call_operand.vmem [shape: f32[3,63], index: 3, kind: input, shape index: {}]
  %s4 = inlined_call_operand.hbm [shape: f32[3,27], index: 4, kind: input, shape index: {}]
  %s5 = inlined_call_operand.vmem [shape: f32[63,32], index: 5, kind: input, shape index: {}]
  %s6 = inlined_call_operand.hbm [shape: f32[1,32], index: 6, kind: input, shape index: {}]
  %s7 = inlined_call_operand.vmem [shape: f32[7,32,32], index: 7, kind: input, shape index: {}]
  %s8 = inlined_call_operand.vmem [shape: f32[7,1,32], index: 8, kind: input, shape index: {}]
  %s9 = inlined_call_operand.hbm [shape: f32[27,32], index: 9, kind: input, shape index: {}]
  %s10 = inlined_call_operand.hbm [shape: f32[32,33], index: 10, kind: input, shape index: {}]
  %s11 = inlined_call_operand.hbm [shape: f32[1,33], index: 11, kind: input, shape index: {}]
  %s12 = inlined_call_operand.vmem [shape: f32[32,4], index: 12, kind: input, shape index: {}]
  %s13 = inlined_call_operand.hbm [shape: f32[1,4], index: 13, kind: input, shape index: {}]
  %s14 = inlined_call_operand.vmem [shape: f32[2,8,4], index: 14, kind: output, shape index: {}]
  %s15 = sld [smem:[#allocation0]]
  $region124: #{mlp_gauss_forward.1} parent=0
    _
  %s17 = ssub.s32 1, %s15
  %s18 = scalar_select 0, %s17, %s15
  $region1: #{mlp_gauss_forward.1} parent=0
    #allocation2 [shape = 'u8[1024]{0}', space=smem, size = 0x400, scoped, tag = 'input window, operand 0, single buffered']
    #allocation3 [shape = 's32[2]{0}', space=sflag, size = 0x8, scoped, tag = 'scoped memory for mlp_gauss_forward.1']
    #allocation4 [shape = 's32[2]{0}', space=sflag, size = 0x8, scoped, tag = 'scoped memory for mlp_gauss_forward.1']
    #allocation5 [shape = 'u8[2048]{0}', space=vmem, size = 0x800, scoped, tag = 'input window, operand 4, single buffered']
    #allocation6 [shape = 'u8[512]{0}', space=vmem, size = 0x400, scoped, tag = 'input window, operand 6, single buffered']
    #allocation7 [shape = 's32[1]{0}', space=sflag, size = 0x4, scoped, tag = 'scoped memory for mlp_gauss_forward.1']
    #allocation8 [shape = 'u8[16384]{0}', space=vmem, size = 0x4000, scoped, tag = 'input window, operand 9, single buffered']
    #allocation9 [shape = 'u8[16384]{0}', space=vmem, size = 0x4000, scoped, tag = 'input window, operand 10, single buffered']
    #allocation10 [shape = 's32[1]{0}', space=sflag, size = 0x4, scoped, tag = 'scoped memory for mlp_gauss_forward.1']
    #allocation11 [shape = 'u8[512]{0}', space=vmem, size = 0x400, scoped, tag = 'input window, operand 11, single buffered']
    #allocation12 [shape = 'u8[512]{0}', space=vmem, size = 0x400, scoped, tag = 'input window, operand 13, single buffered']
    #allocation13 [shape = 's32[1]{0}', space=sflag, size = 0x4, scoped, tag = 'scoped memory for mlp_gauss_forward.1']
    %19 = vsyncpa [#allocation4], 0
    %20 = vsyncpa [#allocation3], 0
    %21 = vsyncpa [#allocation7], 0
    %22 = vsyncpa [#allocation10], 0
    %23 = vsyncpa [#allocation13], 0
    loop: start=0, step=1, limit=4
    $region2: #{mlp_gauss_forward.1} parent=1 // loop_pre_header
      _
    $region3: #{mlp_gauss_forward.1} parent=1 // loop_header
      %s25 = sphi 0, %s29
      %p26 = scmp.ge.s32.totalorder %s25, 4
      %s32 = sphi 0, %s44
      %s33 = sphi 0, %s40
      %s34 = sphi 0, %s32
      %s35 = sphi 0, %s33
      %s36 = sphi 0, %s34
      %s37 = sphi 0, %s35
      %s45 = sphi 0, %s45
      %s47 = sphi 0, %s45
      %s48 = sphi 0, %s47
      %s62 = sphi 0, %s48
      %s70 = sphi 0, %s72
      %s73 = sphi 0, %s70
      %s74 = sphi 0, %s73
      %s90 = sphi 0, %s74
      %s98 = sphi 0, %s100
      %s101 = sphi 0, %s98
      %s102 = sphi 0, %s101
      %s118 = sphi 0, %s102
      %s122 = sphi 0, %s122
      %s124 = sphi 0, %s122
      %s125 = sphi 0, %s124
      %s139 = sphi 0, %s125
      %s143 = sphi 0, %s143
      %s145 = sphi 0, %s143
      %s146 = sphi 0, %s145
      %s160 = sphi 0, %s146
      %s164 = sphi 0, %s164
      %s166 = sphi 0, %s164
      %s167 = sphi 0, %s166
      %s181 = sphi 0, %s167
      %s185 = sphi 0, %s185
      %s187 = sphi 0, %s185
      %s188 = sphi 0, %s187
      %s202 = sphi 0, %s188
      %s206 = sphi 0, %s206
      %s208 = sphi 0, %s206
      %s209 = sphi 0, %s208
      %s223 = sphi 0, %s209
      %s227 = sphi 0, %s227
      %s229 = sphi 0, %s227
      %s230 = sphi 0, %s229
      %s244 = sphi 0, %s230
      %s248 = sphi 0, %s248
      %s250 = sphi 0, %s248
      %s251 = sphi 0, %s250
      %s265 = sphi 0, %s251
      %s269 = sphi 0, %s269
      %s271 = sphi 0, %s269
      %s272 = sphi 0, %s271
      %s286 = sphi 0, %s272
      %s290 = sphi 0, %s290
      %s292 = sphi 0, %s290
      %s293 = sphi 0, %s292
      %s307 = sphi 0, %s293
      %s311 = sphi 0, %s311
      %s313 = sphi 0, %s311
      %s314 = sphi 0, %s313
      %s328 = sphi 0, %s314
      %s332 = sphi 0, %s332
      %s334 = sphi 0, %s332
      %s335 = sphi 0, %s334
      %s349 = sphi 0, %s335
      %s357 = sphi 0, %s359
      %s360 = sphi 0, %s357
      %s361 = sphi 0, %s360
      %s377 = sphi 0, %s361
    $region4: #{mlp_gauss_forward.1} parent=1 // loop_header_branch
      %28 = sbr.rel (%p26) target = $region8
    $region5: #{mlp_gauss_forward.1} parent=1 // loop_body
      %s30 = ssub.s32 %s25, 1
      %s31 = ssub.s32 %s25, 2
      %s38 = sadd.s32 1, %s33
      %p39 = scmp.ge.s32.totalorder %s38, 1
      %s40 = scalar_select %p39, 0, %s38
      %s41 = sadd.s32 1, %s32
      %s42 = scalar_select %p39, %s41, %s32
      %p43 = scmp.ge.s32.totalorder %s42, 2
      %s44 = scalar_select %p43, 0, %s42
      %s46 = sadd.s32 %s45, 1
      %p49 = scmp.eq.s32.totalorder %s25, 1
      %p50 = scmp.ne.s32.totalorder %s45, %s47
      %p51 = scmp.eq.s32.totalorder %s25, 0
      %p52 = por %p50, %p51
      %p53 = scmp.ne.s32.totalorder %s45, %s47
      %p54 = scmp.eq.s32.totalorder %s30, 1
      %p55 = por %p53, %p54
      %p56 = scmp.ne.s32.totalorder %s47, %s48
      %p57 = scmp.eq.s32.totalorder %s30, 0
      %p58 = por %p56, %p57
      %p59 = scmp.ne.s32.totalorder %s47, %s48
      %p60 = scmp.eq.s32.totalorder %s31, 1
      %p61 = por %p59, %p60
      %p63 = scmp.ne.s32.totalorder %s48, %s62
      %p64 = scmp.eq.s32.totalorder %s31, 0
      %p65 = por %p63, %p64
      %s66 = ssub.s32 %s32, %s44
      %s67 = ssub.s32 %s33, %s40
      %s68 = sor.u32 %s66, %s67
      %p69 = scmp.eq.s32.totalorder %s68, 0
      %s71 = sadd.s32 %s70, 1
      %s72 = scalar_select %p69, %s70, %s71
      %p75 = pneg %p69
      %p76 = scmp.eq.s32.totalorder %s25, 1
      %p77 = por %p75, %p76
      %p78 = scmp.ne.s32.totalorder %s70, %s73
      %p79 = scmp.eq.s32.totalorder %s25, 0
      %p80 = por %p78, %p79
      %p81 = scmp.ne.s32.totalorder %s70, %s73
      %p82 = scmp.eq.s32.totalorder %s30, 1
      %p83 = por %p81, %p82
      %p84 = scmp.ne.s32.totalorder %s73, %s74
      %p85 = scmp.eq.s32.totalorder %s30, 0
      %p86 = por %p84, %p85
      %p87 = scmp.ne.s32.totalorder %s73, %s74
      %p88 = scmp.eq.s32.totalorder %s31, 1
      %p89 = por %p87, %p88
      %p91 = scmp.ne.s32.totalorder %s74, %s90
      %p92 = scmp.eq.s32.totalorder %s31, 0
      %p93 = por %p91, %p92
      %s94 = ssub.s32 %s32, %s44
      %s95 = ssub.s32 %s33, %s40
      %s96 = sor.u32 %s94, %s95
      %p97 = scmp.eq.s32.totalorder %s96, 0
      %s99 = sadd.s32 %s98, 1
      %s100 = scalar_select %p97, %s98, %s99
      %p103 = pneg %p97
      %p104 = scmp.eq.s32.totalorder %s25, 1
      %p105 = por %p103, %p104
      %p106 = scmp.ne.s32.totalorder %s98, %s101
      %p107 = scmp.eq.s32.totalorder %s25, 0
      %p108 = por %p106, %p107
      %p109 = scmp.ne.s32.totalorder %s98, %s101
      %p110 = scmp.eq.s32.totalorder %s30, 1
      %p111 = por %p109, %p110
      %p112 = scmp.ne.s32.totalorder %s101, %s102
      %p113 = scmp.eq.s32.totalorder %s30, 0
      %p114 = por %p112, %p113
      %p115 = scmp.ne.s32.totalorder %s101, %s102
      %p116 = scmp.eq.s32.totalorder %s31, 1
      %p117 = por %p115, %p116
      %p119 = scmp.ne.s32.totalorder %s102, %s118
      %p120 = scmp.eq.s32.totalorder %s31, 0
      %p121 = por %p119, %p120
      %s123 = sadd.s32 %s122, 1
      %p126 = scmp.eq.s32.totalorder %s25, 1
      %p127 = scmp.ne.s32.totalorder %s122, %s124
      %p128 = scmp.eq.s32.totalorder %s25, 0
      %p129 = por %p127, %p128
      %p130 = scmp.ne.s32.totalorder %s122, %s124
      %p131 = scmp.eq.s32.totalorder %s30, 1
      %p132 = por %p130, %p131
      %p133 = scmp.ne.s32.totalorder %s124, %s125
      %p134 = scmp.eq.s32.totalorder %s30, 0
      %p135 = por %p133, %p134
      %p136 = scmp.ne.s32.totalorder %s124, %s125
      %p137 = scmp.eq.s32.totalorder %s31, 1
      %p138 = por %p136, %p137
      %p140 = scmp.ne.s32.totalorder %s125, %s139
      %p141 = scmp.eq.s32.totalorder %s31, 0
      %p142 = por %p140, %p141
      %s144 = sadd.s32 %s143, 1
      %p147 = scmp.eq.s32.totalorder %s25, 1
      %p148 = scmp.ne.s32.totalorder %s143, %s145
      %p149 = scmp.eq.s32.totalorder %s25, 0
      %p150 = por %p148, %p149
      %p151 = scmp.ne.s32.totalorder %s143, %s145
      %p152 = scmp.eq.s32.totalorder %s30, 1
      %p153 = por %p151, %p152
      %p154 = scmp.ne.s32.totalorder %s145, %s146
      %p155 = scmp.eq.s32.totalorder %s30, 0
      %p156 = por %p154, %p155
      %p157 = scmp.ne.s32.totalorder %s145, %s146
      %p158 = scmp.eq.s32.totalorder %s31, 1
      %p159 = por %p157, %p158
      %p161 = scmp.ne.s32.totalorder %s146, %s160
      %p162 = scmp.eq.s32.totalorder %s31, 0
      %p163 = por %p161, %p162
      %s165 = sadd.s32 %s164, 1
      %p168 = scmp.eq.s32.totalorder %s25, 1
      %p169 = scmp.ne.s32.totalorder %s164, %s166
      %p170 = scmp.eq.s32.totalorder %s25, 0
      %p171 = por %p169, %p170
      %p172 = scmp.ne.s32.totalorder %s164, %s166
      %p173 = scmp.eq.s32.totalorder %s30, 1
      %p174 = por %p172, %p173
      %p175 = scmp.ne.s32.totalorder %s166, %s167
      %p176 = scmp.eq.s32.totalorder %s30, 0
      %p177 = por %p175, %p176
      %p178 = scmp.ne.s32.totalorder %s166, %s167
      %p179 = scmp.eq.s32.totalorder %s31, 1
      %p180 = por %p178, %p179
      %p182 = scmp.ne.s32.totalorder %s167, %s181
      %p183 = scmp.eq.s32.totalorder %s31, 0
      %p184 = por %p182, %p183
      %s186 = sadd.s32 %s185, 1
      %p189 = scmp.eq.s32.totalorder %s25, 1
      %p190 = scmp.ne.s32.totalorder %s185, %s187
      %p191 = scmp.eq.s32.totalorder %s25, 0
      %p192 = por %p190, %p191
      %p193 = scmp.ne.s32.totalorder %s185, %s187
      %p194 = scmp.eq.s32.totalorder %s30, 1
      %p195 = por %p193, %p194
      %p196 = scmp.ne.s32.totalorder %s187, %s188
      %p197 = scmp.eq.s32.totalorder %s30, 0
      %p198 = por %p196, %p197
      %p199 = scmp.ne.s32.totalorder %s187, %s188
      %p200 = scmp.eq.s32.totalorder %s31, 1
      %p201 = por %p199, %p200
      %p203 = scmp.ne.s32.totalorder %s188, %s202
      %p204 = scmp.eq.s32.totalorder %s31, 0
      %p205 = por %p203, %p204
      %s207 = sadd.s32 %s206, 1
      %p210 = scmp.eq.s32.totalorder %s25, 1
      %p211 = scmp.ne.s32.totalorder %s206, %s208
      %p212 = scmp.eq.s32.totalorder %s25, 0
      %p213 = por %p211, %p212
      %p214 = scmp.ne.s32.totalorder %s206, %s208
      %p215 = scmp.eq.s32.totalorder %s30, 1
      %p216 = por %p214, %p215
      %p217 = scmp.ne.s32.totalorder %s208, %s209
      %p218 = scmp.eq.s32.totalorder %s30, 0
      %p219 = por %p217, %p218
      %p220 = scmp.ne.s32.totalorder %s208, %s209
      %p221 = scmp.eq.s32.totalorder %s31, 1
      %p222 = por %p220, %p221
      %p224 = scmp.ne.s32.totalorder %s209, %s223
      %p225 = scmp.eq.s32.totalorder %s31, 0
      %p226 = por %p224, %p225
      %s228 = sadd.s32 %s227, 1
      %p231 = scmp.eq.s32.totalorder %s25, 1
      %p232 = scmp.ne.s32.totalorder %s227, %s229
      %p233 = scmp.eq.s32.totalorder %s25, 0
      %p234 = por %p232, %p233
      %p235 = scmp.ne.s32.totalorder %s227, %s229
      %p236 = scmp.eq.s32.totalorder %s30, 1
      %p237 = por %p235, %p236
      %p238 = scmp.ne.s32.totalorder %s229, %s230
      %p239 = scmp.eq.s32.totalorder %s30, 0
      %p240 = por %p238, %p239
      %p241 = scmp.ne.s32.totalorder %s229, %s230
      %p242 = scmp.eq.s32.totalorder %s31, 1
      %p243 = por %p241, %p242
      %p245 = scmp.ne.s32.totalorder %s230, %s244
      %p246 = scmp.eq.s32.totalorder %s31, 0
      %p247 = por %p245, %p246
      %s249 = sadd.s32 %s248, 1
      %p252 = scmp.eq.s32.totalorder %s25, 1
      %p253 = scmp.ne.s32.totalorder %s248, %s250
      %p254 = scmp.eq.s32.totalorder %s25, 0
      %p255 = por %p253, %p254
      %p256 = scmp.ne.s32.totalorder %s248, %s250
      %p257 = scmp.eq.s32.totalorder %s30, 1
      %p258 = por %p256, %p257
      %p259 = scmp.ne.s32.totalorder %s250, %s251
      %p260 = scmp.eq.s32.totalorder %s30, 0
      %p261 = por %p259, %p260
      %p262 = scmp.ne.s32.totalorder %s250, %s251
      %p263 = scmp.eq.s32.totalorder %s31, 1
      %p264 = por %p262, %p263
      %p266 = scmp.ne.s32.totalorder %s251, %s265
      %p267 = scmp.eq.s32.totalorder %s31, 0
      %p268 = por %p266, %p267
      %s270 = sadd.s32 %s269, 1
      %p273 = scmp.eq.s32.totalorder %s25, 1
      %p274 = scmp.ne.s32.totalorder %s269, %s271
      %p275 = scmp.eq.s32.totalorder %s25, 0
      %p276 = por %p274, %p275
      %p277 = scmp.ne.s32.totalorder %s269, %s271
      %p278 = scmp.eq.s32.totalorder %s30, 1
      %p279 = por %p277, %p278
      %p280 = scmp.ne.s32.totalorder %s271, %s272
      %p281 = scmp.eq.s32.totalorder %s30, 0
      %p282 = por %p280, %p281
      %p283 = scmp.ne.s32.totalorder %s271, %s272
      %p284 = scmp.eq.s32.totalorder %s31, 1
      %p285 = por %p283, %p284
      %p287 = scmp.ne.s32.totalorder %s272, %s286
      %p288 = scmp.eq.s32.totalorder %s31, 0
      %p289 = por %p287, %p288
      %s291 = sadd.s32 %s290, 1
      %p294 = scmp.eq.s32.totalorder %s25, 1
      %p295 = scmp.ne.s32.totalorder %s290, %s292
      %p296 = scmp.eq.s32.totalorder %s25, 0
      %p297 = por %p295, %p296
      %p298 = scmp.ne.s32.totalorder %s290, %s292
      %p299 = scmp.eq.s32.totalorder %s30, 1
      %p300 = por %p298, %p299
      %p301 = scmp.ne.s32.totalorder %s292, %s293
      %p302 = scmp.eq.s32.totalorder %s30, 0
      %p303 = por %p301, %p302
      %p304 = scmp.ne.s32.totalorder %s292, %s293
      %p305 = scmp.eq.s32.totalorder %s31, 1
      %p306 = por %p304, %p305
      %p308 = scmp.ne.s32.totalorder %s293, %s307
      %p309 = scmp.eq.s32.totalorder %s31, 0
      %p310 = por %p308, %p309
      %s312 = sadd.s32 %s311, 1
      %p315 = scmp.eq.s32.totalorder %s25, 1
      %p316 = scmp.ne.s32.totalorder %s311, %s313
      %p317 = scmp.eq.s32.totalorder %s25, 0
      %p318 = por %p316, %p317
      %p319 = scmp.ne.s32.totalorder %s311, %s313
      %p320 = scmp.eq.s32.totalorder %s30, 1
      %p321 = por %p319, %p320
      %p322 = scmp.ne.s32.totalorder %s313, %s314
      %p323 = scmp.eq.s32.totalorder %s30, 0
      %p324 = por %p322, %p323
      %p325 = scmp.ne.s32.totalorder %s313, %s314
      %p326 = scmp.eq.s32.totalorder %s31, 1
      %p327 = por %p325, %p326
      %p329 = scmp.ne.s32.totalorder %s314, %s328
      %p330 = scmp.eq.s32.totalorder %s31, 0
      %p331 = por %p329, %p330
      %s333 = sadd.s32 %s332, 1
      %p336 = scmp.eq.s32.totalorder %s25, 1
      %p337 = scmp.ne.s32.totalorder %s332, %s334
      %p338 = scmp.eq.s32.totalorder %s25, 0
      %p339 = por %p337, %p338
      %p340 = scmp.ne.s32.totalorder %s332, %s334
      %p341 = scmp.eq.s32.totalorder %s30, 1
      %p342 = por %p340, %p341
      %p343 = scmp.ne.s32.totalorder %s334, %s335
      %p344 = scmp.eq.s32.totalorder %s30, 0
      %p345 = por %p343, %p344
      %p346 = scmp.ne.s32.totalorder %s334, %s335
      %p347 = scmp.eq.s32.totalorder %s31, 1
      %p348 = por %p346, %p347
      %p350 = scmp.ne.s32.totalorder %s335, %s349
      %p351 = scmp.eq.s32.totalorder %s31, 0
      %p352 = por %p350, %p351
      %s353 = ssub.s32 %s32, %s44
      %s354 = ssub.s32 %s33, %s40
      %s355 = sor.u32 %s353, %s354
      %p356 = scmp.eq.s32.totalorder %s355, 0
      %s358 = sadd.s32 %s357, 1
      %s359 = scalar_select %p356, %s357, %s358
      %p362 = pneg %p356
      %p363 = scmp.eq.s32.totalorder %s25, 1
      %p364 = por %p362, %p363
      %p365 = scmp.ne.s32.totalorder %s357, %s360
      %p366 = scmp.eq.s32.totalorder %s25, 0
      %p367 = por %p365, %p366
      %p368 = scmp.ne.s32.totalorder %s357, %s360
      %p369 = scmp.eq.s32.totalorder %s30, 1
      %p370 = por %p368, %p369
      %p371 = scmp.ne.s32.totalorder %s360, %s361
      %p372 = scmp.eq.s32.totalorder %s30, 0
      %p373 = por %p371, %p372
      %p374 = scmp.ne.s32.totalorder %s360, %s361
      %p375 = scmp.eq.s32.totalorder %s31, 1
      %p376 = por %p374, %p375
      %p378 = scmp.ne.s32.totalorder %s361, %s377
      %p379 = scmp.eq.s32.totalorder %s31, 0
      %p380 = por %p378, %p379
      %p381 = scmp.le.s32.totalorder 1, %s25
      %p382 = scmp.lt.s32.totalorder %s25, 3
      %p383 = pnand %p381, %p382
      %p384 = pneg %p383
      // Predicated region
      $region9: #{mlp_gauss_forward.1} parent=5 // pred_check
        _
      $region10: #{mlp_gauss_forward.1} parent=5 // pred_check_branch
        %386 = sbr.rel (%p383) target = $region12
      $region11: #{mlp_gauss_forward.1} parent=5 // pred_region
        %s387 = ssub.s32 %s25, 1
        // Predicated region
        $region13: #{mlp_gauss_forward.1} parent=11 // pred_check
          %p388 = pneg %p58
        $region14: #{mlp_gauss_forward.1} parent=11 // pred_check_branch
          %390 = sbr.rel (%p388) target = $region16
        $region15: #{mlp_gauss_forward.1} parent=11 // pred_region
          %s392 = ssub.s32 32, 32
          %393 = vsyncadd [#allocation4], %s392
          %s395 = sshll.u32 %s0, 4
          %s396 = int_to_ptr.vmem [resolvable:$true] %s395
          %398 = dma.vmem_to_smem %s396, 32, [#allocation2], [#allocation4]
        $region16: #{mlp_gauss_forward.1} parent=11 // pred_fallthru
          _
        // Predicated region
        $region17: #{mlp_gauss_forward.1} parent=11 // pred_check
          %p399 = pneg %p135
        $region18: #{mlp_gauss_forward.1} parent=11 // pred_check_branch
          %401 = sbr.rel (%p399) target = $region20
        $region19: #{mlp_gauss_forward.1} parent=11 // pred_region
          _
        $region20: #{mlp_gauss_forward.1} parent=11 // pred_fallthru
          _
        // Predicated region
        $region21: #{mlp_gauss_forward.1} parent=11 // pred_check
          %p402 = pneg %p156
        $region22: #{mlp_gauss_forward.1} parent=11 // pred_check_branch
          %404 = sbr.rel (%p402) target = $region24
        $region23: #{mlp_gauss_forward.1} parent=11 // pred_region
          %s406 = ssub.s32 64, 64
          %407 = vsyncadd [#allocation3], %s406
          %s409 = sshll.u32 [#allocation5], 4
          %s410 = int_to_ptr.vmem [resolvable:$true] %s409
          %412 = dma.hbm_to_vmem [thread:$0]  %s4, 64, %s410, [#allocation3]
        $region24: #{mlp_gauss_forward.1} parent=11 // pred_fallthru
          _
        // Predicated region
        $region25: #{mlp_gauss_forward.1} parent=11 // pred_check
          %p413 = pneg %p177
        $region26: #{mlp_gauss_forward.1} parent=11 // pred_check_branch
          %415 = sbr.rel (%p413) target = $region28
        $region27: #{mlp_gauss_forward.1} parent=11 // pred_region
          _
        $region28: #{mlp_gauss_forward.1} parent=11 // pred_fallthru
          _
        // Predicated region
        $region29: #{mlp_gauss_forward.1} parent=11 // pred_check
          %p416 = pneg %p198
        $region30: #{mlp_gauss_forward.1} parent=11 // pred_check_branch
          %418 = sbr.rel (%p416) target = $region32
        $region31: #{mlp_gauss_forward.1} parent=11 // pred_region
          %s420 = ssub.s32 16, 16
          %421 = vsyncadd [#allocation7], %s420
          %s423 = sshll.u32 [#allocation6], 4
          %s424 = int_to_ptr.vmem [resolvable:$true] %s423
          %426 = dma.hbm_to_vmem [thread:$0]  %s6, 16, %s424, [#allocation7]
        $region32: #{mlp_gauss_forward.1} parent=11 // pred_fallthru
          _
        // Predicated region
        $region33: #{mlp_gauss_forward.1} parent=11 // pred_check
          %p427 = pneg %p219
        $region34: #{mlp_gauss_forward.1} parent=11 // pred_check_branch
          %429 = sbr.rel (%p427) target = $region36
        $region35: #{mlp_gauss_forward.1} parent=11 // pred_region
          _
        $region36: #{mlp_gauss_forward.1} parent=11 // pred_fallthru
          _
        // Predicated region
        $region37: #{mlp_gauss_forward.1} parent=11 // pred_check
          %p430 = pneg %p240
        $region38: #{mlp_gauss_forward.1} parent=11 // pred_check_branch
          %432 = sbr.rel (%p430) target = $region40
        $region39: #{mlp_gauss_forward.1} parent=11 // pred_region
          _
        $region40: #{mlp_gauss_forward.1} parent=11 // pred_fallthru
          _
        // Predicated region
        $region41: #{mlp_gauss_forward.1} parent=11 // pred_check
          %p433 = pneg %p261
        $region42: #{mlp_gauss_forward.1} parent=11 // pred_check_branch
          %435 = sbr.rel (%p433) target = $region44
        $region43: #{mlp_gauss_forward.1} parent=11 // pred_region
          %s437 = ssub.s32 512, 512
          %438 = vsyncadd [#allocation7], %s437
          %s439 = sshll.u32 [#allocation8], 4
          %s440 = int_to_ptr.vmem [resolvable:$true] %s439
          %445 = dma.hbm_to_vmem [thread:$0]  %s9, 512, %s440, [#allocation7], 128, 128, 8
        $region44: #{mlp_gauss_forward.1} parent=11 // pred_fallthru
          _
        // Predicated region
        $region45: #{mlp_gauss_forward.1} parent=11 // pred_check
          %p446 = pneg %p282
        $region46: #{mlp_gauss_forward.1} parent=11 // pred_check_branch
          %448 = sbr.rel (%p446) target = $region48
        $region47: #{mlp_gauss_forward.1} parent=11 // pred_region
          %s450 = ssub.s32 512, 512
          %451 = vsyncadd [#allocation10], %s450
          %s452 = sshll.u32 [#allocation9], 4
          %s453 = int_to_ptr.vmem [resolvable:$true] %s452
          %458 = dma.hbm_to_vmem [thread:$0]  %s10, 512, %s453, [#allocation10], 128, 128, 8
        $region48: #{mlp_gauss_forward.1} parent=11 // pred_fallthru
          _
        // Predicated region
        $region49: #{mlp_gauss_forward.1} parent=11 // pred_check
          %p459 = pneg %p303
        $region50: #{mlp_gauss_forward.1} parent=11 // pred_check_branch
          %461 = sbr.rel (%p459) target = $region52
        $region51: #{mlp_gauss_forward.1} parent=11 // pred_region
          %s463 = ssub.s32 16, 16
          %464 = vsyncadd [#allocation10], %s463
          %s466 = sshll.u32 [#allocation11], 4
          %s467 = int_to_ptr.vmem [resolvable:$true] %s466
          %469 = dma.hbm_to_vmem [thread:$0]  %s11, 16, %s467, [#allocation10]
        $region52: #{mlp_gauss_forward.1} parent=11 // pred_fallthru
          _
        // Predicated region
        $region53: #{mlp_gauss_forward.1} parent=11 // pred_check
          %p470 = pneg %p324
        $region54: #{mlp_gauss_forward.1} parent=11 // pred_check_branch
          %472 = sbr.rel (%p470) target = $region56
        $region55: #{mlp_gauss_forward.1} parent=11 // pred_region
          _
        $region56: #{mlp_gauss_forward.1} parent=11 // pred_fallthru
          _
        // Predicated region
        $region57: #{mlp_gauss_forward.1} parent=11 // pred_check
          %p473 = pneg %p345
        $region58: #{mlp_gauss_forward.1} parent=11 // pred_check_branch
          %475 = sbr.rel (%p473) target = $region60
        $region59: #{mlp_gauss_forward.1} parent=11 // pred_region
          %s477 = ssub.s32 16, 16
          %478 = vsyncadd [#allocation13], %s477
          %s480 = sshll.u32 [#allocation12], 4
          %s481 = int_to_ptr.vmem [resolvable:$true] %s480
          %483 = dma.hbm_to_vmem [thread:$0]  %s13, 16, %s481, [#allocation13]
        $region60: #{mlp_gauss_forward.1} parent=11 // pred_fallthru
          _
      $region12: #{mlp_gauss_forward.1} parent=5 // pred_fallthru
        _
      %p484 = scmp.lt.s32.totalorder %s25, 2
      // Predicated region
      $region61: #{mlp_gauss_forward.1} parent=5 // pred_check
        %p485 = pneg %p484
      $region62: #{mlp_gauss_forward.1} parent=5 // pred_check_branch
        %487 = sbr.rel (%p485) target = $region64
      $region63: #{mlp_gauss_forward.1} parent=5 // pred_region
        // Predicated region
        $region65: #{mlp_gauss_forward.1} parent=63 // pred_check
          %p488 = pneg %p80
        $region66: #{mlp_gauss_forward.1} parent=63 // pred_check_branch
          %490 = sbr.rel (%p488) target = $region68
        $region67: #{mlp_gauss_forward.1} parent=63 // pred_region
          %p491 = scmp.lt.s32.totalorder %s32, 1
          %s492 = scalar_select %p491, %s32, 1
          %p493 = scmp.lt.s32.totalorder %s33, 0
          %s494 = scalar_select %p493, %s33, 0
          %s495 = sadd.s32 %s494, %s492
          %s496 = smul.addr %s495, 8
          %s497 = scalar_lea.vmem %s1, %s496
        $region68: #{mlp_gauss_forward.1} parent=63 // pred_fallthru
          _
        // Predicated region
        $region69: #{mlp_gauss_forward.1} parent=63 // pred_check
          %p498 = pneg %p108
        $region70: #{mlp_gauss_forward.1} parent=63 // pred_check_branch
          %500 = sbr.rel (%p498) target = $region72
        $region71: #{mlp_gauss_forward.1} parent=63 // pred_region
          %p501 = scmp.lt.s32.totalorder %s32, 1
          %s502 = scalar_select %p501, %s32, 1
          %p503 = scmp.lt.s32.totalorder %s33, 0
          %s504 = scalar_select %p503, %s33, 0
          %s505 = sadd.s32 %s504, %s502
          %s506 = smul.addr %s505, 8
          %s507 = scalar_lea.vmem %s2, %s506
        $region72: #{mlp_gauss_forward.1} parent=63 // pred_fallthru
          _
      $region64: #{mlp_gauss_forward.1} parent=5 // pred_fallthru
        _
      %p508 = scmp.le.s32.totalorder 1, %s25
      %p509 = scmp.lt.s32.totalorder %s25, 3
      %p510 = pnand %p508, %p509
      %p511 = pneg %p510
      // Predicated region
      $region73: #{mlp_gauss_forward.1} parent=5 // pred_check
        _
      $region74: #{mlp_gauss_forward.1} parent=5 // pred_check_branch
        %513 = sbr.rel (%p510) target = $region76
      $region75: #{mlp_gauss_forward.1} parent=5 // pred_region
        %s514 = ssub.s32 %s25, 1
        // Predicated region
        $region77: #{mlp_gauss_forward.1} parent=75 // pred_check
          %p515 = pneg %p58
        $region78: #{mlp_gauss_forward.1} parent=75 // pred_check_branch
          %517 = sbr.rel (%p515) target = $region80
        $region79: #{mlp_gauss_forward.1} parent=75 // pred_region
          %518 = dma.done [#allocation4], 32
        $region80: #{mlp_gauss_forward.1} parent=75 // pred_fallthru
          _
        // Predicated region
        $region81: #{mlp_gauss_forward.1} parent=75 // pred_check
          %p519 = pneg %p156
        $region82: #{mlp_gauss_forward.1} parent=75 // pred_check_branch
          %521 = sbr.rel (%p519) target = $region84
        $region83: #{mlp_gauss_forward.1} parent=75 // pred_region
          %522 = dma.done [#allocation3], 64
        $region84: #{mlp_gauss_forward.1} parent=75 // pred_fallthru
          _
        // Predicated region
        $region85: #{mlp_gauss_forward.1} parent=75 // pred_check
          %p523 = pneg %p198
        $region86: #{mlp_gauss_forward.1} parent=75 // pred_check_branch
          %525 = sbr.rel (%p523) target = $region88
        $region87: #{mlp_gauss_forward.1} parent=75 // pred_region
          %526 = dma.done [#allocation7], 16
        $region88: #{mlp_gauss_forward.1} parent=75 // pred_fallthru
          _
        // Predicated region
        $region89: #{mlp_gauss_forward.1} parent=75 // pred_check
          %p527 = pneg %p261
        $region90: #{mlp_gauss_forward.1} parent=75 // pred_check_branch
          %529 = sbr.rel (%p527) target = $region92
        $region91: #{mlp_gauss_forward.1} parent=75 // pred_region
          %530 = dma.done [#allocation7], 512
        $region92: #{mlp_gauss_forward.1} parent=75 // pred_fallthru
          _
        // Predicated region
        $region93: #{mlp_gauss_forward.1} parent=75 // pred_check
          %p531 = pneg %p282
        $region94: #{mlp_gauss_forward.1} parent=75 // pred_check_branch
          %533 = sbr.rel (%p531) target = $region96
        $region95: #{mlp_gauss_forward.1} parent=75 // pred_region
          %534 = dma.done [#allocation10], 512
        $region96: #{mlp_gauss_forward.1} parent=75 // pred_fallthru
          _
        // Predicated region
        $region97: #{mlp_gauss_forward.1} parent=75 // pred_check
          %p535 = pneg %p303
        $region98: #{mlp_gauss_forward.1} parent=75 // pred_check_branch
          %537 = sbr.rel (%p535) target = $region100
        $region99: #{mlp_gauss_forward.1} parent=75 // pred_region
          %538 = dma.done [#allocation10], 16
        $region100: #{mlp_gauss_forward.1} parent=75 // pred_fallthru
          _
        // Predicated region
        $region101: #{mlp_gauss_forward.1} parent=75 // pred_check
          %p539 = pneg %p345
        $region102: #{mlp_gauss_forward.1} parent=75 // pred_check_branch
          %541 = sbr.rel (%p539) target = $region104
        $region103: #{mlp_gauss_forward.1} parent=75 // pred_region
          %542 = dma.done [#allocation13], 16
        $region104: #{mlp_gauss_forward.1} parent=75 // pred_fallthru
          _
        %543 = sfence
        %p544 = pneg %p58
        %p545 = pneg %p55
        %p546 = scmp.lt.s32.totalorder %s34, 1
        %s547 = scalar_select %p546, %s34, 1
        %p548 = scmp.lt.s32.totalorder %s35, 0
        %s549 = scalar_select %p548, %s35, 0
        %s550 = sadd.s32 %s549, %s547
        %s551 = smul.addr %s550, 8
        %s552 = scalar_lea.vmem %s1, %s551
        %p553 = pneg %p86
        %p554 = pneg %p83
        %p555 = scmp.lt.s32.totalorder %s34, 1
        %s556 = scalar_select %p555, %s34, 1
        %p557 = scmp.lt.s32.totalorder %s35, 0
        %s558 = scalar_select %p557, %s35, 0
        %s559 = sadd.s32 %s558, %s556
        %s560 = smul.addr %s559, 8
        %s561 = scalar_lea.vmem %s2, %s560
        %p562 = pneg %p114
        %p563 = pneg %p111
        %p564 = pneg %p135
        %p565 = pneg %p132
        %p566 = pneg %p156
        %p567 = pneg %p153
        %p568 = pneg %p177
        %p569 = pneg %p174
        %p570 = pneg %p198
        %p571 = pneg %p195
        %p572 = pneg %p219
        %p573 = pneg %p216
        %p574 = pneg %p240
        %p575 = pneg %p237
        %p576 = pneg %p261
        %p577 = pneg %p258
        %p578 = pneg %p282
        %p579 = pneg %p279
        %p580 = pneg %p303
        %p581 = pneg %p300
        %p582 = pneg %p324
        %p583 = pneg %p321
        %p584 = pneg %p345
        %p585 = pneg %p342
        %p586 = pneg %p373
        %p587 = pneg %p370
        %p588 = scmp.lt.s32.totalorder %s34, 1
        %s589 = scalar_select %p588, %s34, 1
        %p590 = scmp.lt.s32.totalorder %s35, 0
        %s591 = scalar_select %p590, %s35, 0
        %s592 = sadd.s32 %s591, %s589
        %s593 = smul.addr %s592, 8
        %s594 = scalar_lea.vmem %s14, %s593
        %p595 = scmp.lt.s32.totalorder %s34, 1
        %s596 = scalar_select %p595, %s34, 1
        %p597 = scmp.lt.s32.totalorder %s35, 0
        %s598 = scalar_select %p597, %s35, 0
        %s599 = sadd.s32 %s598, %s596
        %s600 = smul.addr %s599, 8
        %s601 = scalar_lea.vmem %s1, %s600
        %p602 = scmp.lt.s32.totalorder %s34, 1
        %s603 = scalar_select %p602, %s34, 1
        %p604 = scmp.lt.s32.totalorder %s35, 0
        %s605 = scalar_select %p604, %s35, 0
        %s606 = sadd.s32 %s605, %s603
        %s607 = smul.addr %s606, 8
        %s608 = scalar_lea.vmem %s2, %s607
        %p609 = scmp.lt.s32.totalorder %s34, 1
        %s610 = scalar_select %p609, %s34, 1
        %p611 = scmp.lt.s32.totalorder %s35, 0
        %s612 = scalar_select %p611, %s35, 0
        %s613 = sadd.s32 %s612, %s610
        %s614 = smul.addr %s613, 8
        %s615 = scalar_lea.vmem %s14, %s614
        %v616 = vld [vmem:[%s601] sm:$0xff]
        %v617 = vld [vmem:[%s3] sm:$0x1]
        %619 = vset.pattern.permute.xlu0 0
        %620 = vperm.xlu0 %619, %v616
        %v621 = vpop.permute.xlu0 %620
        %v623 = vlaneseq
        %v624 = vshrl.u32 %v623, 7
        %v625 = vsub.s32 0, %v624
        %v626 = vrot.slane %v617, %v625
        %v627 = vmul.f32 %v621, %v626
        %v628 = vld [vmem:[%s3 + $0x1] sm:$0x1]
        %629 = vset.pattern.permute.xlu0 1
        %630 = vperm.xlu0 %629, %v616
        %v631 = vpop.permute.xlu0 %630
        %v633 = vlaneseq
        %v634 = vshrl.u32 %v633, 7
        %v635 = vsub.s32 0, %v634
        %v636 = vrot.slane %v628, %v635
        %v637 = vmul.f32 %v631, %v636
        %v638 = vadd.f32 %v627, %v637
        %v639 = vld [vmem:[%s3 + $0x2] sm:$0x1]
        %640 = vset.pattern.permute.xlu0 2
        %641 = vperm.xlu0 %640, %v616
        %v642 = vpop.permute.xlu0 %641
        %v644 = vlaneseq
        %v645 = vshrl.u32 %v644, 7
        %v646 = vsub.s32 0, %v645
        %v647 = vrot.slane %v639, %v646
        %v648 = vmul.f32 %v642, %v647
        %v649 = vadd.f32 %v638, %v648
        %v650 = vlaneseq
        %v651 = vand.u32 %v650, 127
        %vm652 = vcmp.lt.s32.totalorder %v651, 3
        %vm653 = vcmp.lt.s32.totalorder %v651, 33
        %v654 = vand.u32 2147483647, %v649
        %vm655 = vcmp.le.f32.partialorder %v654, 0.7853982
        %vm656 = vcmp.lt.s32.totalorder %v649, 0
        %v657 = vand.u32 %v649, 2139095040
        %v658 = vshrl.u32 %v657, 23
        %v659 = vsub.s32 %v658, 127
        %v660 = vand.u32 2147483647, %v649
        %v661 = vand.u32 %v660, 8388607
        %v662 = vor.u32 %v661, 8388608
        %v663 = vsub.s32 0, %v662
        %v664 = vadd.s32 %v659, 1
        %vm665 = vcmp.gt.s32.totalorder %v664, 0
        %v666 = vsel %vm665, %v664, 0
        %v667 = vshrl.u32 %v666, 5
        %v668 = vand.u32 %v666, 31
        %v669 = vsub.s32 32, %v668
        %v670 = vshrl.u32 683565275, %v669
        %v671 = vshll.u32 683565275, %v668
        %v672 = vshrl.u32 2475754826, %v669
        %v673 = vor.u32 %v671, %v672
        %v674 = vshll.u32 2475754826, %v668
        %v675 = vshrl.u32 2131351028, %v669
        %v676 = vor.u32 %v674, %v675
        %v677 = vshll.u32 2131351028, %v668
        %v678 = vshrl.u32 2102212464, %v669
        %v679 = vor.u32 %v677, %v678
        %v680 = vshll.u32 2102212464, %v668
        %v681 = vshrl.u32 920167782, %v669
        %v682 = vor.u32 %v680, %v681
        %v683 = vshll.u32 920167782, %v668
        %v684 = vshrl.u32 1326507024, %v669
        %v685 = vor.u32 %v683, %v684
        %vm686 = vcmp.lt.s32.totalorder %v667, 1
        %vm687 = vcmp.lt.s32.totalorder %v667, 2
        %vm688 = vcmp.lt.s32.totalorder %v667, 3
        %vm689 = vcmp.lt.s32.totalorder %v667, 4
        %v690 = vsel %vm686, %v670, %v673
        %v691 = vsel %vm689, %v679, 2102212464
        %v692 = vsel %vm688, %v676, %v691
        %v693 = vsel %vm687, %v690, %v692
        %v694 = vsel %vm686, %v673, %v676
        %v695 = vsel %vm689, %v682, 920167782
        %v696 = vsel %vm688, %v679, %v695
        %v697 = vsel %vm687, %v694, %v696
        %v698 = vsel %vm686, %v676, %v679
        %v699 = vsel %vm689, %v685, 1326507024
        %v700 = vsel %vm688, %v682, %v699
        %v701 = vsel %vm687, %v698, %v700
        %v702 = vshll.u32 %v662, 8
        %v703 = vmul.u32.u64.compose %v702, %v701
        %v704 = vextract.low.u32 %v703
        %v705 = vextract.high.u32 %v703
        %v706 = vmul.u32.u64.compose %v702, %v697
        %v707 = vextract.low.u32 %v706
        %v708 = vextract.high.u32 %v706
        %v709 = vmul.u32 %v702, %v693
        %v710 = vadd.s32 %v705, %v707
        %vm711 = vc.u32 %v705, %v707
        %v712 = vadd.s32 %v708, 1
        %v713 = vsel %vm711, %v712, %v708
        %v714 = vadd.s32 %v709, %v713
        %v715 = vadd.s32 %v714, 536870912
        %v716 = vshrl.u32 %v715, 30
        %v717 = vshll.u32 %v716, 30
        %v718 = vsub.s32 %v714, %v717
        %vm719 = vcmp.lt.s32.totalorder %v718, 0
        %v720 = vsub.s32 0, %v718
        %v721 = vsel %vm719, %v720, %v718
        %v722 = vclz %v721
        %v723 = vsub.s32 %v722, 2
        %vm724 = vcmp.gt.s32.totalorder 0, %v723
        %v725 = vsel %vm724, 0, %v723
        %v726 = vsub.s32 32, %v725
        %v727 = vshll.u32 %v718, %v725
        %v728 = vshrl.u32 %v710, %v726
        %v729 = vor.u32 %v727, %v728
        %v730 = vsub.s32 4294967266, %v725
        %v731 = vadd.s32 %v730, 127
        %v732 = vshll.u32 %v731, 23
        %v733 = vor.u32 4788187, %v732
        %v734 = vand.u32 2147483647, %v733
        %v736 = vcvt.s32.f32 %v729
        %v737 = vmul.f32 %v736, %v734
        %v738 = vxor.u32 %v737, 2147483648
        %v739 = vsel %vm656, %v738, %v737
        %v740 = vsub.s32 4, %v716
        %v741 = vsel %vm656, %v740, %v716
        %v742 = vsel %vm655, %v649, %v739
        %v743 = vsel %vm655, 0, %v741
        %v744 = vcosq.f32.pop %v742
        %v745 = vsinq.f32.pop %v742
        %vm746 = vweird.f32 %v649
        %v747 = vadd.s32 %v743, 3
        %v748 = vand.u32 %v747, 3
        %vm749 = vcmp.lt.s32.totalorder %v748, 2
        %vm750 = vcmp.eq.s32.totalorder %v748, 0
        %v751 = vxor.u32 %v745, 2147483648
        %v752 = vsel %vm750, %v744, %v751
        %vm753 = vcmp.eq.s32.totalorder %v748, 2
        %v754 = vxor.u32 %v744, 2147483648
        %v755 = vsel %vm753, %v754, %v745
        %v756 = vsel %vm749, %v752, %v755
        %v757 = vsel %vm746, nan, %v756
        %v758 = vand.u32 2147483647, %v649
        %vm759 = vcmp.le.f32.partialorder %v758, 0.7853982
        %vm760 = vcmp.lt.s32.totalorder %v649, 0
        %v761 = vand.u32 %v649, 2139095040
        %v762 = vshrl.u32 %v761, 23
        %v763 = vsub.s32 %v762, 127
        %v764 = vand.u32 2147483647, %v649
        %v765 = vand.u32 %v764, 8388607
        %v766 = vor.u32 %v765, 8388608
        %v767 = vsub.s32 0, %v766
        %v768 = vadd.s32 %v763, 1
        %vm769 = vcmp.gt.s32.totalorder %v768, 0
        %v770 = vsel %vm769, %v768, 0
        %v771 = vshrl.u32 %v770, 5
        %v772 = vand.u32 %v770, 31
        %v773 = vsub.s32 32, %v772
        %v774 = vshrl.u32 683565275, %v773
        %v775 = vshll.u32 683565275, %v772
        %v776 = vshrl.u32 2475754826, %v773
        %v777 = vor.u32 %v775, %v776
        %v778 = vshll.u32 2475754826, %v772
        %v779 = vshrl.u32 2131351028, %v773
        %v780 = vor.u32 %v778, %v779
        %v781 = vshll.u32 2131351028, %v772
        %v782 = vshrl.u32 2102212464, %v773
        %v783 = vor.u32 %v781, %v782
        %v784 = vshll.u32 2102212464, %v772
        %v785 = vshrl.u32 920167782, %v773
        %v786 = vor.u32 %v784, %v785
        %v787 = vshll.u32 920167782, %v772
        %v788 = vshrl.u32 1326507024, %v773
        %v789 = vor.u32 %v787, %v788
        %vm790 = vcmp.lt.s32.totalorder %v771, 1
        %vm791 = vcmp.lt.s32.totalorder %v771, 2
        %vm792 = vcmp.lt.s32.totalorder %v771, 3
        %vm793 = vcmp.lt.s32.totalorder %v771, 4
        %v794 = vsel %vm790, %v774, %v777
        %v795 = vsel %vm793, %v783, 2102212464
        %v796 = vsel %vm792, %v780, %v795
        %v797 = vsel %vm791, %v794, %v796
        %v798 = vsel %vm790, %v777, %v780
        %v799 = vsel %vm793, %v786, 920167782
        %v800 = vsel %vm792, %v783, %v799
        %v801 = vsel %vm791, %v798, %v800
        %v802 = vsel %vm790, %v780, %v783
        %v803 = vsel %vm793, %v789, 1326507024
        %v804 = vsel %vm792, %v786, %v803
        %v805 = vsel %vm791, %v802, %v804
        %v806 = vshll.u32 %v766, 8
        %v807 = vmul.u32.u64.compose %v806, %v805
        %v808 = vextract.low.u32 %v807
        %v809 = vextract.high.u32 %v807
        %v810 = vmul.u32.u64.compose %v806, %v801
        %v811 = vextract.low.u32 %v810
        %v812 = vextract.high.u32 %v810
        %v813 = vmul.u32 %v806, %v797
        %v814 = vadd.s32 %v809, %v811
        %vm815 = vc.u32 %v809, %v811
        %v816 = vadd.s32 %v812, 1
        %v817 = vsel %vm815, %v816, %v812
        %v818 = vadd.s32 %v813, %v817
        %v819 = vadd.s32 %v818, 536870912
        %v820 = vshrl.u32 %v819, 30
        %v821 = vshll.u32 %v820, 30
        %v822 = vsub.s32 %v818, %v821
        %vm823 = vcmp.lt.s32.totalorder %v822, 0
        %v824 = vsub.s32 0, %v822
        %v825 = vsel %vm823, %v824, %v822
        %v826 = vclz %v825
        %v827 = vsub.s32 %v826, 2
        %vm828 = vcmp.gt.s32.totalorder 0, %v827
        %v829 = vsel %vm828, 0, %v827
        %v830 = vsub.s32 32, %v829
        %v831 = vshll.u32 %v822, %v829
        %v832 = vshrl.u32 %v814, %v830
        %v833 = vor.u32 %v831, %v832
        %v834 = vsub.s32 4294967266, %v829
        %v835 = vadd.s32 %v834, 127
        %v836 = vshll.u32 %v835, 23
        %v837 = vor.u32 4788187, %v836
        %v838 = vand.u32 2147483647, %v837
        %v840 = vcvt.s32.f32 %v833
        %v841 = vmul.f32 %v840, %v838
        %v842 = vxor.u32 %v841, 2147483648
        %v843 = vsel %vm760, %v842, %v841
        %v844 = vsub.s32 4, %v820
        %v845 = vsel %vm760, %v844, %v820
        %v846 = vsel %vm759, %v649, %v843
        %v847 = vsel %vm759, 0, %v845
        %v848 = vcosq.f32.pop %v846
        %v849 = vsinq.f32.pop %v846
        %vm850 = vweird.f32 %v649
        %v851 = vand.u32 %v847, 3
        %vm852 = vcmp.lt.s32.totalorder %v851, 2
        %vm853 = vcmp.eq.s32.totalorder %v851, 0
        %v854 = vxor.u32 %v849, 2147483648
        %v855 = vsel %vm853, %v848, %v854
        %vm856 = vcmp.eq.s32.totalorder %v851, 2
        %v857 = vxor.u32 %v848, 2147483648
        %v858 = vsel %vm856, %v857, %v849
        %v859 = vsel %vm852, %v855, %v858
        %v860 = vsel %vm850, nan, %v859
        %v861 = vsel %vm653, %v757, %v860
        %v862 = vsel %vm652, %v649, %v861
        %v863 = vld [vmem:[%s5] sm:$0xff]
        %v864 = vld [vmem:[%s5 + $0x8] sm:$0xff]
        %v865 = vld [vmem:[%s5 + $0x10] sm:$0xff]
        %v866 = vld [vmem:[%s5 + $0x18] sm:$0xff]
        %v867 = vld [vmem:[%s5 + $0x20] sm:$0xff]
        %v868 = vld [vmem:[%s5 + $0x28] sm:$0xff]
        %v869 = vld [vmem:[%s5 + $0x30] sm:$0xff]
        %v870 = vld [vmem:[%s5 + $0x38] sm:$0x7f]
        %v871 = vld [vmem:[#allocation6] sm:$0x1]
        %v873 = vlaneseq
        %v874 = vshrl.u32 %v873, 7
        %v875 = vsub.s32 0, %v874
        %v876 = vrot.slane %v871, %v875
        %vm878 = vcmask 515072
        %v880 = vsel %vm878, %v862, 0
        %vm882 = vcmask 1046528
        %v884 = vsel %vm882, %v870, 0
        %886 = vmatprep.subr.mxu0 0.0
        %887 = vmatpush1.msra.mxu0 %v863
        %888 = vmatprep.subr.mxu0 0.0
        %889 = vmatpush1.msra.mxu0 %v864
        %890 = vmatprep.subr.mxu0 0.0
        %891 = vmatpush1.msra.mxu0 %v865
        %892 = vmatprep.subr.mxu0 0.0
        %893 = vmatpush1.msra.mxu0 %v866
        %894 = vmatprep.subr.mxu0 0.0
        %895 = vmatpush1.msra.mxu0 %v867
        %896 = vmatprep.subr.mxu0 0.0
        %897 = vmatpush1.msra.mxu0 %v868
        %898 = vmatprep.subr.mxu0 0.0
        %899 = vmatpush1.msra.mxu0 %v869
        %900 = vmatprep.subr.mxu0 0.0
        %901 = vmatpush1.msra.mxu0 %v884
        %902 = vmatprep.subr.mxu0 0.0
        %903 = vmatpush1.msra.mxu0 0.0
        %904 = vmatprep.subr.mxu0 0.0
        %905 = vmatpush1.msra.mxu0 0.0
        %906 = vmatprep.subr.mxu0 0.0
        %907 = vmatpush1.msra.mxu0 0.0
        %908 = vmatprep.subr.mxu0 0.0
        %909 = vmatpush1.msra.mxu0 0.0
        %910 = vmatprep.subr.mxu0 0.0
        %911 = vmatpush1.msra.mxu0 0.0
        %912 = vmatprep.subr.mxu0 0.0
        %913 = vmatpush1.msra.mxu0 0.0
        %914 = vmatprep.subr.mxu0 0.0
        %915 = vmatpush1.msra.mxu0 0.0
        %916 = vmatprep.subr.mxu0 0.0
        %917 = vmatpush1.msra.mxu0 0.0
        %918 = vmatprep.subr.mxu0 0.0
        %919 = vmatpush1.msra.mxu0 0.0
        %920 = vmatprep.subr.mxu0 0.0
        %921 = vmatpush1.msra.mxu0 0.0
        %922 = vmatprep.subr.mxu0 0.0
        %923 = vmatpush1.msra.mxu0 0.0
        %924 = vmatprep.subr.mxu0 0.0
        %925 = vmatpush1.msra.mxu0 0.0
        %926 = vmatprep.subr.mxu0 0.0
        %927 = vmatpush1.msra.mxu0 0.0
        %928 = vmatprep.subr.mxu0 0.0
        %929 = vmatpush1.msra.mxu0 0.0
        %930 = vmatprep.subr.mxu0 0.0
        %931 = vmatpush1.msra.mxu0 0.0
        %932 = vmatprep.subr.mxu0 0.0
        %933 = vmatpush1.msra.mxu0 0.0
        %934 = vmatprep.subr.mxu0 0.0
        %935 = vmatpush1.msra.mxu0 0.0
        %936 = vmatprep.subr.mxu0 0.0
        %937 = vmatpush1.msra.mxu0 0.0
        %938 = vmatprep.subr.mxu0 0.0
        %939 = vmatpush1.msra.mxu0 0.0
        %940 = vmatprep.subr.mxu0 0.0
        %941 = vmatpush1.msra.mxu0 0.0
        %942 = vmatprep.subr.mxu0 0.0
        %943 = vmatpush1.msra.mxu0 0.0
        %944 = vmatprep.subr.mxu0 0.0
        %945 = vmatpush1.msra.mxu0 0.0
        %946 = vmatprep.subr.mxu0 0.0
        %947 = vmatpush1.msra.mxu0 0.0
        %948 = vmatprep.subr.mxu0 0.0
        %949 = vmatpush1.msra.mxu0 0.0
        %950 = vmatprep.mubr.f32.mxu0 0.0
        %951 = vmatmul.mubr.f32.gmra.mrb[0].mxu0 %v880
        %v952 = vpop.f32.mrb[0].mxu0
        %v953 = vadd.f32 %v876, %v952
        %v954 = vpop.f32.mrb[0].mxu0
        %955 = vdwg.mxu0
        %v956 = vmul.f32 %v953, %v953
        %v957 = vmul.f32 %v956, -12.5
        %v958 = vmul.f32 %v957, 1.442695
        %v959 = vpow.pop %v958
        loop: start=0, step=1, limit=7
        $region105: #{mlp_gauss_forward.1} parent=75 // loop_pre_header
          _
        $region106: #{mlp_gauss_forward.1} parent=75 // loop_header
          %s961 = sphi 0, %s965
          %p962 = scmp.ge.s32.totalorder %s961, 7
          %v966 = vphi %v959, %v1080
        $region107: #{mlp_gauss_forward.1} parent=75 // loop_header_branch
          %964 = sbr.rel (%p962) target = $region111
        $region108: #{mlp_gauss_forward.1} parent=75 // loop_body
          %s967 = smul.u32 %s961, 32
          %s968 = scalar_lea.vmem %s7, %s967
          %v969 = vld [vmem:[%s968] sm:$0xff]
          %v970 = vld [vmem:[%s968 + $0x8] sm:$0xff]
          %v971 = vld [vmem:[%s968 + $0x10] sm:$0xff]
          %v972 = vld [vmem:[%s968 + $0x18] sm:$0xff]
          %s973 = scalar_lea.vmem %s8, %s961
          %v974 = vld [vmem:[%s973] sm:$0x1]
          %v976 = vlaneseq
          %v977 = vshrl.u32 %v976, 7
          %v978 = vsub.s32 0, %v977
          %v979 = vrot.slane %v974, %v978
          %vm981 = vcmask 261120
          %v983 = vsel %vm981, %v966, 0
          %985 = vmatprep.subr.mxu0 0.0
          %986 = vmatpush1.msra.mxu0 %v969
          %987 = vmatprep.subr.mxu0 0.0
          %988 = vmatpush1.msra.mxu0 %v970
          %989 = vmatprep.subr.mxu0 0.0
          %990 = vmatpush1.msra.mxu0 %v971
          %991 = vmatprep.subr.mxu0 0.0
          %992 = vmatpush1.msra.mxu0 %v972
          %993 = vmatprep.subr.mxu0 0.0
          %994 = vmatpush1.msra.mxu0 0.0
          %995 = vmatprep.subr.mxu0 0.0
          %996 = vmatpush1.msra.mxu0 0.0
          %997 = vmatprep.subr.mxu0 0.0
          %998 = vmatpush1.msra.mxu0 0.0
          %999 = vmatprep.subr.mxu0 0.0
          %1000 = vmatpush1.msra.mxu0 0.0
          %1001 = vmatprep.subr.mxu0 0.0
          %1002 = vmatpush1.msra.mxu0 0.0
          %1003 = vmatprep.subr.mxu0 0.0
          %1004 = vmatpush1.msra.mxu0 0.0
          %1005 = vmatprep.subr.mxu0 0.0
          %1006 = vmatpush1.msra.mxu0 0.0
          %1007 = vmatprep.subr.mxu0 0.0
          %1008 = vmatpush1.msra.mxu0 0.0
          %1009 = vmatprep.subr.mxu0 0.0
          %1010 = vmatpush1.msra.mxu0 0.0
          %1011 = vmatprep.subr.mxu0 0.0
          %1012 = vmatpush1.msra.mxu0 0.0
          %1013 = vmatprep.subr.mxu0 0.0
          %1014 = vmatpush1.msra.mxu0 0.0
          %1015 = vmatprep.subr.mxu0 0.0
          %1016 = vmatpush1.msra.mxu0 0.0
          %1017 = vmatprep.subr.mxu0 0.0
          %1018 = vmatpush1.msra.mxu0 0.0
          %1019 = vmatprep.subr.mxu0 0.0
          %1020 = vmatpush1.msra.mxu0 0.0
          %1021 = vmatprep.subr.mxu0 0.0
          %1022 = vmatpush1.msra.mxu0 0.0
          %1023 = vmatprep.subr.mxu0 0.0
          %1024 = vmatpush1.msra.mxu0 0.0
          %1025 = vmatprep.subr.mxu0 0.0
          %1026 = vmatpush1.msra.mxu0 0.0
          %1027 = vmatprep.subr.mxu0 0.0
          %1028 = vmatpush1.msra.mxu0 0.0
          %1029 = vmatprep.subr.mxu0 0.0
          %1030 = vmatpush1.msra.mxu0 0.0
          %1031 = vmatprep.subr.mxu0 0.0
          %1032 = vmatpush1.msra.mxu0 0.0
          %1033 = vmatprep.subr.mxu0 0.0
          %1034 = vmatpush1.msra.mxu0 0.0
          %1035 = vmatprep.subr.mxu0 0.0
          %1036 = vmatpush1.msra.mxu0 0.0
          %1037 = vmatprep.subr.mxu0 0.0
          %1038 = vmatpush1.msra.mxu0 0.0
          %1039 = vmatprep.subr.mxu0 0.0
          %1040 = vmatpush1.msra.mxu0 0.0
          %1041 = vmatprep.subr.mxu0 0.0
          %1042 = vmatpush1.msra.mxu0 0.0
          %1043 = vmatprep.subr.mxu0 0.0
          %1044 = vmatpush1.msra.mxu0 0.0
          %1045 = vmatprep.subr.mxu0 0.0
          %1046 = vmatpush1.msra.mxu0 0.0
          %1047 = vmatprep.subr.mxu0 0.0
          %1048 = vmatpush1.msra.mxu0 0.0
          %1049 = vmatprep.mubr.f32.mxu0 0.0
          %1050 = vmatmul.mubr.f32.gmra.mrb[0].mxu0 %v983
          %v1051 = vpop.f32.mrb[0].mxu0
          %v1052 = vadd.f32 %v979, %v1051
          %v1053 = vpop.f32.mrb[0].mxu0
          %1054 = vdwg.mxu0
          %s1055 = smul.u32 %s961, 2
          %s1056 = sshra.s32 %s1055, 7
          %s1057 = sand.u32 %s1055, 127
          %s1058 = sadd.s32 %s1056, %s34
          %s1059 = smul.u32 %s1058, 128
          %s1060 = sshra.s32 %s1055, 7
          %s1061 = sand.u32 %s1055, 127
          %s1062 = sadd.s32 %s1059, %s1061
          %s1063 = sld [smem:[#allocation2 + %s1062]]
          %s1064 = sadd.s32 %s1055, 1
          %s1065 = sshra.s32 %s1064, 7
          %s1066 = sand.u32 %s1064, 127
          %s1067 = sadd.s32 %s1065, %s34
          %s1068 = smul.u32 %s1067, 128
          %s1069 = sshra.s32 %s1064, 7
          %s1070 = sand.u32 %s1064, 127
          %s1071 = sadd.s32 %s1068, %s1070
          %s1072 = sld [smem:[#allocation2 + %s1071]]
          %v1073 = vmul.f32 %v1052, %v1052
          %v1074 = vmul.f32 %v1073, -12.5
          %v1075 = vmul.f32 %v1074, 1.442695
          %v1076 = vpow.pop %v1075
          %v1077 = vstv %s1063
          %v1078 = vmul.f32 %v1076, %v1077
          %v1079 = vstv %s1072
          %v1080 = vadd.f32 %v1078, %v1079
        $region109: #{mlp_gauss_forward.1} parent=75 // loop_footer
          %s965 = sadd.s32 1, %s961
        $region110: #{mlp_gauss_forward.1} parent=75 // loop_footer_branch
          %960 = sbr.rel target = $region106
        $region111: #{mlp_gauss_forward.1} parent=75 // loop_exit
          _
        %v1081 = vld [vmem:[#allocation9] sm:$0xff]
        %v1082 = vld [vmem:[#allocation9 + $0x8] sm:$0xff]
        %v1083 = vld [vmem:[#allocation9 + $0x10] sm:$0xff]
        %v1084 = vld [vmem:[#allocation9 + $0x18] sm:$0xff]
        %v1085 = vld [vmem:[#allocation11] sm:$0x1]
        %v1087 = vlaneseq
        %v1088 = vshrl.u32 %v1087, 7
        %v1089 = vsub.s32 0, %v1088
        %v1090 = vrot.slane %v1085, %v1089
        %vm1092 = vcmask 261120
        %v1094 = vsel %vm1092, %v966, 0
        %1096 = vmatprep.subr.mxu0 0.0
        %1097 = vmatpush1.msra.mxu0 %v1081
        %1098 = vmatprep.subr.mxu0 0.0
        %1099 = vmatpush1.msra.mxu0 %v1082
        %1100 = vmatprep.subr.mxu0 0.0
        %1101 = vmatpush1.msra.mxu0 %v1083
        %1102 = vmatprep.subr.mxu0 0.0
        %1103 = vmatpush1.msra.mxu0 %v1084
        %1104 = vmatprep.subr.mxu0 0.0
        %1105 = vmatpush1.msra.mxu0 0.0
        %1106 = vmatprep.subr.mxu0 0.0
        %1107 = vmatpush1.msra.mxu0 0.0
        %1108 = vmatprep.subr.mxu0 0.0
        %1109 = vmatpush1.msra.mxu0 0.0
        %1110 = vmatprep.subr.mxu0 0.0
        %1111 = vmatpush1.msra.mxu0 0.0
        %1112 = vmatprep.subr.mxu0 0.0
        %1113 = vmatpush1.msra.mxu0 0.0
        %1114 = vmatprep.subr.mxu0 0.0
        %1115 = vmatpush1.msra.mxu0 0.0
        %1116 = vmatprep.subr.mxu0 0.0
        %1117 = vmatpush1.msra.mxu0 0.0
        %1118 = vmatprep.subr.mxu0 0.0
        %1119 = vmatpush1.msra.mxu0 0.0
        %1120 = vmatprep.subr.mxu0 0.0
        %1121 = vmatpush1.msra.mxu0 0.0
        %1122 = vmatprep.subr.mxu0 0.0
        %1123 = vmatpush1.msra.mxu0 0.0
        %1124 = vmatprep.subr.mxu0 0.0
        %1125 = vmatpush1.msra.mxu0 0.0
        %1126 = vmatprep.subr.mxu0 0.0
        %1127 = vmatpush1.msra.mxu0 0.0
        %1128 = vmatprep.subr.mxu0 0.0
        %1129 = vmatpush1.msra.mxu0 0.0
        %1130 = vmatprep.subr.mxu0 0.0
        %1131 = vmatpush1.msra.mxu0 0.0
        %1132 = vmatprep.subr.mxu0 0.0
        %1133 = vmatpush1.msra.mxu0 0.0
        %1134 = vmatprep.subr.mxu0 0.0
        %1135 = vmatpush1.msra.mxu0 0.0
        %1136 = vmatprep.subr.mxu0 0.0
        %1137 = vmatpush1.msra.mxu0 0.0
        %1138 = vmatprep.subr.mxu0 0.0
        %1139 = vmatpush1.msra.mxu0 0.0
        %1140 = vmatprep.subr.mxu0 0.0
        %1141 = vmatpush1.msra.mxu0 0.0
        %1142 = vmatprep.subr.mxu0 0.0
        %1143 = vmatpush1.msra.mxu0 0.0
        %1144 = vmatprep.subr.mxu0 0.0
        %1145 = vmatpush1.msra.mxu0 0.0
        %1146 = vmatprep.subr.mxu0 0.0
        %1147 = vmatpush1.msra.mxu0 0.0
        %1148 = vmatprep.subr.mxu0 0.0
        %1149 = vmatpush1.msra.mxu0 0.0
        %1150 = vmatprep.subr.mxu0 0.0
        %1151 = vmatpush1.msra.mxu0 0.0
        %1152 = vmatprep.subr.mxu0 0.0
        %1153 = vmatpush1.msra.mxu0 0.0
        %1154 = vmatprep.subr.mxu0 0.0
        %1155 = vmatpush1.msra.mxu0 0.0
        %1156 = vmatprep.subr.mxu0 0.0
        %1157 = vmatpush1.msra.mxu0 0.0
        %1158 = vmatprep.subr.mxu0 0.0
        %1159 = vmatpush1.msra.mxu0 0.0
        %1160 = vmatprep.mubr.f32.mxu0 0.0
        %1161 = vmatmul.mubr.f32.gmra.mrb[0].mxu0 %v1094
        %v1162 = vpop.f32.mrb[0].mxu0
        %v1163 = vadd.f32 %v1090, %v1162
        %v1164 = vpop.f32.mrb[0].mxu0
        %1165 = vdwg.mxu0
        %v1166 = vld [vmem:[%s608] sm:$0xff]
        %v1167 = vld [vmem:[#allocation5] sm:$0x1]
        %1169 = vset.pattern.permute.xlu0 0
        %1170 = vperm.xlu0 %1169, %v1166
        %v1171 = vpop.permute.xlu0 %1170
        %v1173 = vlaneseq
        %v1174 = vshrl.u32 %v1173, 7
        %v1175 = vsub.s32 0, %v1174
        %v1176 = vrot.slane %v1167, %v1175
        %v1177 = vmul.f32 %v1171, %v1176
        %v1178 = vld [vmem:[#allocation5 + $0x1] sm:$0x1]
        %1179 = vset.pattern.permute.xlu0 1
        %1180 = vperm.xlu0 %1179, %v1166
        %v1181 = vpop.permute.xlu0 %1180
        %v1183 = vlaneseq
        %v1184 = vshrl.u32 %v1183, 7
        %v1185 = vsub.s32 0, %v1184
        %v1186 = vrot.slane %v1178, %v1185
        %v1187 = vmul.f32 %v1181, %v1186
        %v1188 = vadd.f32 %v1177, %v1187
        %v1189 = vld [vmem:[#allocation5 + $0x2] sm:$0x1]
        %1190 = vset.pattern.permute.xlu0 2
        %1191 = vperm.xlu0 %1190, %v1166
        %v1192 = vpop.permute.xlu0 %1191
        %v1194 = vlaneseq
        %v1195 = vshrl.u32 %v1194, 7
        %v1196 = vsub.s32 0, %v1195
        %v1197 = vrot.slane %v1189, %v1196
        %v1198 = vmul.f32 %v1192, %v1197
        %v1199 = vadd.f32 %v1188, %v1198
        %vm1200 = vcmp.lt.s32.totalorder %v651, 15
        %v1201 = vand.u32 2147483647, %v1199
        %vm1202 = vcmp.le.f32.partialorder %v1201, 0.7853982
        %vm1203 = vcmp.lt.s32.totalorder %v1199, 0
        %v1204 = vand.u32 %v1199, 2139095040
        %v1205 = vshrl.u32 %v1204, 23
        %v1206 = vsub.s32 %v1205, 127
        %v1207 = vand.u32 2147483647, %v1199
        %v1208 = vand.u32 %v1207, 8388607
        %v1209 = vor.u32 %v1208, 8388608
        %v1210 = vsub.s32 0, %v1209
        %v1211 = vadd.s32 %v1206, 1
        %vm1212 = vcmp.gt.s32.totalorder %v1211, 0
        %v1213 = vsel %vm1212, %v1211, 0
        %v1214 = vshrl.u32 %v1213, 5
        %v1215 = vand.u32 %v1213, 31
        %v1216 = vsub.s32 32, %v1215
        %v1217 = vshrl.u32 683565275, %v1216
        %v1218 = vshll.u32 683565275, %v1215
        %v1219 = vshrl.u32 2475754826, %v1216
        %v1220 = vor.u32 %v1218, %v1219
        %v1221 = vshll.u32 2475754826, %v1215
        %v1222 = vshrl.u32 2131351028, %v1216
        %v1223 = vor.u32 %v1221, %v1222
        %v1224 = vshll.u32 2131351028, %v1215
        %v1225 = vshrl.u32 2102212464, %v1216
        %v1226 = vor.u32 %v1224, %v1225
        %v1227 = vshll.u32 2102212464, %v1215
        %v1228 = vshrl.u32 920167782, %v1216
        %v1229 = vor.u32 %v1227, %v1228
        %v1230 = vshll.u32 920167782, %v1215
        %v1231 = vshrl.u32 1326507024, %v1216
        %v1232 = vor.u32 %v1230, %v1231
        %vm1233 = vcmp.lt.s32.totalorder %v1214, 1
        %vm1234 = vcmp.lt.s32.totalorder %v1214, 2
        %vm1235 = vcmp.lt.s32.totalorder %v1214, 3
        %vm1236 = vcmp.lt.s32.totalorder %v1214, 4
        %v1237 = vsel %vm1233, %v1217, %v1220
        %v1238 = vsel %vm1236, %v1226, 2102212464
        %v1239 = vsel %vm1235, %v1223, %v1238
        %v1240 = vsel %vm1234, %v1237, %v1239
        %v1241 = vsel %vm1233, %v1220, %v1223
        %v1242 = vsel %vm1236, %v1229, 920167782
        %v1243 = vsel %vm1235, %v1226, %v1242
        %v1244 = vsel %vm1234, %v1241, %v1243
        %v1245 = vsel %vm1233, %v1223, %v1226
        %v1246 = vsel %vm1236, %v1232, 1326507024
        %v1247 = vsel %vm1235, %v1229, %v1246
        %v1248 = vsel %vm1234, %v1245, %v1247
        %v1249 = vshll.u32 %v1209, 8
        %v1250 = vmul.u32.u64.compose %v1249, %v1248
        %v1251 = vextract.low.u32 %v1250
        %v1252 = vextract.high.u32 %v1250
        %v1253 = vmul.u32.u64.compose %v1249, %v1244
        %v1254 = vextract.low.u32 %v1253
        %v1255 = vextract.high.u32 %v1253
        %v1256 = vmul.u32 %v1249, %v1240
        %v1257 = vadd.s32 %v1252, %v1254
        %vm1258 = vc.u32 %v1252, %v1254
        %v1259 = vadd.s32 %v1255, 1
        %v1260 = vsel %vm1258, %v1259, %v1255
        %v1261 = vadd.s32 %v1256, %v1260
        %v1262 = vadd.s32 %v1261, 536870912
        %v1263 = vshrl.u32 %v1262, 30
        %v1264 = vshll.u32 %v1263, 30
        %v1265 = vsub.s32 %v1261, %v1264
        %vm1266 = vcmp.lt.s32.totalorder %v1265, 0
        %v1267 = vsub.s32 0, %v1265
        %v1268 = vsel %vm1266, %v1267, %v1265
        %v1269 = vclz %v1268
        %v1270 = vsub.s32 %v1269, 2
        %vm1271 = vcmp.gt.s32.totalorder 0, %v1270
        %v1272 = vsel %vm1271, 0, %v1270
        %v1273 = vsub.s32 32, %v1272
        %v1274 = vshll.u32 %v1265, %v1272
        %v1275 = vshrl.u32 %v1257, %v1273
        %v1276 = vor.u32 %v1274, %v1275
        %v1277 = vsub.s32 4294967266, %v1272
        %v1278 = vadd.s32 %v1277, 127
        %v1279 = vshll.u32 %v1278, 23
        %v1280 = vor.u32 4788187, %v1279
        %v1281 = vand.u32 2147483647, %v1280
        %v1283 = vcvt.s32.f32 %v1276
        %v1284 = vmul.f32 %v1283, %v1281
        %v1285 = vxor.u32 %v1284, 2147483648
        %v1286 = vsel %vm1203, %v1285, %v1284
        %v1287 = vsub.s32 4, %v1263
        %v1288 = vsel %vm1203, %v1287, %v1263
        %v1289 = vsel %vm1202, %v1199, %v1286
        %v1290 = vsel %vm1202, 0, %v1288
        %v1291 = vcosq.f32.pop %v1289
        %v1292 = vsinq.f32.pop %v1289
        %vm1293 = vweird.f32 %v1199
        %v1294 = vadd.s32 %v1290, 3
        %v1295 = vand.u32 %v1294, 3
        %vm1296 = vcmp.lt.s32.totalorder %v1295, 2
        %vm1297 = vcmp.eq.s32.totalorder %v1295, 0
        %v1298 = vxor.u32 %v1292, 2147483648
        %v1299 = vsel %vm1297, %v1291, %v1298
        %vm1300 = vcmp.eq.s32.totalorder %v1295, 2
        %v1301 = vxor.u32 %v1291, 2147483648
        %v1302 = vsel %vm1300, %v1301, %v1292
        %v1303 = vsel %vm1296, %v1299, %v1302
        %v1304 = vsel %vm1293, nan, %v1303
        %v1305 = vand.u32 2147483647, %v1199
        %vm1306 = vcmp.le.f32.partialorder %v1305, 0.7853982
        %vm1307 = vcmp.lt.s32.totalorder %v1199, 0
        %v1308 = vand.u32 %v1199, 2139095040
        %v1309 = vshrl.u32 %v1308, 23
        %v1310 = vsub.s32 %v1309, 127
        %v1311 = vand.u32 2147483647, %v1199
        %v1312 = vand.u32 %v1311, 8388607
        %v1313 = vor.u32 %v1312, 8388608
        %v1314 = vsub.s32 0, %v1313
        %v1315 = vadd.s32 %v1310, 1
        %vm1316 = vcmp.gt.s32.totalorder %v1315, 0
        %v1317 = vsel %vm1316, %v1315, 0
        %v1318 = vshrl.u32 %v1317, 5
        %v1319 = vand.u32 %v1317, 31
        %v1320 = vsub.s32 32, %v1319
        %v1321 = vshrl.u32 683565275, %v1320
        %v1322 = vshll.u32 683565275, %v1319
        %v1323 = vshrl.u32 2475754826, %v1320
        %v1324 = vor.u32 %v1322, %v1323
        %v1325 = vshll.u32 2475754826, %v1319
        %v1326 = vshrl.u32 2131351028, %v1320
        %v1327 = vor.u32 %v1325, %v1326
        %v1328 = vshll.u32 2131351028, %v1319
        %v1329 = vshrl.u32 2102212464, %v1320
        %v1330 = vor.u32 %v1328, %v1329
        %v1331 = vshll.u32 2102212464, %v1319
        %v1332 = vshrl.u32 920167782, %v1320
        %v1333 = vor.u32 %v1331, %v1332
        %v1334 = vshll.u32 920167782, %v1319
        %v1335 = vshrl.u32 1326507024, %v1320
        %v1336 = vor.u32 %v1334, %v1335
        %vm1337 = vcmp.lt.s32.totalorder %v1318, 1
        %vm1338 = vcmp.lt.s32.totalorder %v1318, 2
        %vm1339 = vcmp.lt.s32.totalorder %v1318, 3
        %vm1340 = vcmp.lt.s32.totalorder %v1318, 4
        %v1341 = vsel %vm1337, %v1321, %v1324
        %v1342 = vsel %vm1340, %v1330, 2102212464
        %v1343 = vsel %vm1339, %v1327, %v1342
        %v1344 = vsel %vm1338, %v1341, %v1343
        %v1345 = vsel %vm1337, %v1324, %v1327
        %v1346 = vsel %vm1340, %v1333, 920167782
        %v1347 = vsel %vm1339, %v1330, %v1346
        %v1348 = vsel %vm1338, %v1345, %v1347
        %v1349 = vsel %vm1337, %v1327, %v1330
        %v1350 = vsel %vm1340, %v1336, 1326507024
        %v1351 = vsel %vm1339, %v1333, %v1350
        %v1352 = vsel %vm1338, %v1349, %v1351
        %v1353 = vshll.u32 %v1313, 8
        %v1354 = vmul.u32.u64.compose %v1353, %v1352
        %v1355 = vextract.low.u32 %v1354
        %v1356 = vextract.high.u32 %v1354
        %v1357 = vmul.u32.u64.compose %v1353, %v1348
        %v1358 = vextract.low.u32 %v1357
        %v1359 = vextract.high.u32 %v1357
        %v1360 = vmul.u32 %v1353, %v1344
        %v1361 = vadd.s32 %v1356, %v1358
        %vm1362 = vc.u32 %v1356, %v1358
        %v1363 = vadd.s32 %v1359, 1
        %v1364 = vsel %vm1362, %v1363, %v1359
        %v1365 = vadd.s32 %v1360, %v1364
        %v1366 = vadd.s32 %v1365, 536870912
        %v1367 = vshrl.u32 %v1366, 30
        %v1368 = vshll.u32 %v1367, 30
        %v1369 = vsub.s32 %v1365, %v1368
        %vm1370 = vcmp.lt.s32.totalorder %v1369, 0
        %v1371 = vsub.s32 0, %v1369
        %v1372 = vsel %vm1370, %v1371, %v1369
        %v1373 = vclz %v1372
        %v1374 = vsub.s32 %v1373, 2
        %vm1375 = vcmp.gt.s32.totalorder 0, %v1374
        %v1376 = vsel %vm1375, 0, %v1374
        %v1377 = vsub.s32 32, %v1376
        %v1378 = vshll.u32 %v1369, %v1376
        %v1379 = vshrl.u32 %v1361, %v1377
        %v1380 = vor.u32 %v1378, %v1379
        %v1381 = vsub.s32 4294967266, %v1376
        %v1382 = vadd.s32 %v1381, 127
        %v1383 = vshll.u32 %v1382, 23
        %v1384 = vor.u32 4788187, %v1383
        %v1385 = vand.u32 2147483647, %v1384
        %v1387 = vcvt.s32.f32 %v1380
        %v1388 = vmul.f32 %v1387, %v1385
        %v1389 = vxor.u32 %v1388, 2147483648
        %v1390 = vsel %vm1307, %v1389, %v1388
        %v1391 = vsub.s32 4, %v1367
        %v1392 = vsel %vm1307, %v1391, %v1367
        %v1393 = vsel %vm1306, %v1199, %v1390
        %v1394 = vsel %vm1306, 0, %v1392
        %v1395 = vcosq.f32.pop %v1393
        %v1396 = vsinq.f32.pop %v1393
        %vm1397 = vweird.f32 %v1199
        %v1398 = vand.u32 %v1394, 3
        %vm1399 = vcmp.lt.s32.totalorder %v1398, 2
        %vm1400 = vcmp.eq.s32.totalorder %v1398, 0
        %v1401 = vxor.u32 %v1396, 2147483648
        %v1402 = vsel %vm1400, %v1395, %v1401
        %vm1403 = vcmp.eq.s32.totalorder %v1398, 2
        %v1404 = vxor.u32 %v1395, 2147483648
        %v1405 = vsel %vm1403, %v1404, %v1396
        %v1406 = vsel %vm1399, %v1402, %v1405
        %v1407 = vsel %vm1397, nan, %v1406
        %v1408 = vsel %vm1200, %v1304, %v1407
        %v1409 = vsel %vm652, %v1199, %v1408
        %v1410 = vld [vmem:[#allocation8] sm:$0xff]
        %v1411 = vld [vmem:[#allocation8 + $0x8] sm:$0xff]
        %v1412 = vld [vmem:[#allocation8 + $0x10] sm:$0xff]
        %v1413 = vld [vmem:[#allocation8 + $0x18] sm:$0x7]
        %vm1414 = vcmask 220160
        %v1416 = vsel %vm1414, %v1409, 0
        %vm1418 = vcmask 1042432
        %v1420 = vsel %vm1418, %v1413, 0
        %1422 = vmatprep.subr.mxu0 0.0
        %1423 = vmatpush1.msra.mxu0 %v1410
        %1424 = vmatprep.subr.mxu0 0.0
        %1425 = vmatpush1.msra.mxu0 %v1411
        %1426 = vmatprep.subr.mxu0 0.0
        %1427 = vmatpush1.msra.mxu0 %v1412
        %1428 = vmatprep.subr.mxu0 0.0
        %1429 = vmatpush1.msra.mxu0 %v1420
        %1430 = vmatprep.subr.mxu0 0.0
        %1431 = vmatpush1.msra.mxu0 0.0
        %1432 = vmatprep.subr.mxu0 0.0
        %1433 = vmatpush1.msra.mxu0 0.0
        %1434 = vmatprep.subr.mxu0 0.0
        %1435 = vmatpush1.msra.mxu0 0.0
        %1436 = vmatprep.subr.mxu0 0.0
        %1437 = vmatpush1.msra.mxu0 0.0
        %1438 = vmatprep.subr.mxu0 0.0
        %1439 = vmatpush1.msra.mxu0 0.0
        %1440 = vmatprep.subr.mxu0 0.0
        %1441 = vmatpush1.msra.mxu0 0.0
        %1442 = vmatprep.subr.mxu0 0.0
        %1443 = vmatpush1.msra.mxu0 0.0
        %1444 = vmatprep.subr.mxu0 0.0
        %1445 = vmatpush1.msra.mxu0 0.0
        %1446 = vmatprep.subr.mxu0 0.0
        %1447 = vmatpush1.msra.mxu0 0.0
        %1448 = vmatprep.subr.mxu0 0.0
        %1449 = vmatpush1.msra.mxu0 0.0
        %1450 = vmatprep.subr.mxu0 0.0
        %1451 = vmatpush1.msra.mxu0 0.0
        %1452 = vmatprep.subr.mxu0 0.0
        %1453 = vmatpush1.msra.mxu0 0.0
        %1454 = vmatprep.subr.mxu0 0.0
        %1455 = vmatpush1.msra.mxu0 0.0
        %1456 = vmatprep.subr.mxu0 0.0
        %1457 = vmatpush1.msra.mxu0 0.0
        %1458 = vmatprep.subr.mxu0 0.0
        %1459 = vmatpush1.msra.mxu0 0.0
        %1460 = vmatprep.subr.mxu0 0.0
        %1461 = vmatpush1.msra.mxu0 0.0
        %1462 = vmatprep.subr.mxu0 0.0
        %1463 = vmatpush1.msra.mxu0 0.0
        %1464 = vmatprep.subr.mxu0 0.0
        %1465 = vmatpush1.msra.mxu0 0.0
        %1466 = vmatprep.subr.mxu0 0.0
        %1467 = vmatpush1.msra.mxu0 0.0
        %1468 = vmatprep.subr.mxu0 0.0
        %1469 = vmatpush1.msra.mxu0 0.0
        %1470 = vmatprep.subr.mxu0 0.0
        %1471 = vmatpush1.msra.mxu0 0.0
        %1472 = vmatprep.subr.mxu0 0.0
        %1473 = vmatpush1.msra.mxu0 0.0
        %1474 = vmatprep.subr.mxu0 0.0
        %1475 = vmatpush1.msra.mxu0 0.0
        %1476 = vmatprep.subr.mxu0 0.0
        %1477 = vmatpush1.msra.mxu0 0.0
        %1478 = vmatprep.subr.mxu0 0.0
        %1479 = vmatpush1.msra.mxu0 0.0
        %1480 = vmatprep.subr.mxu0 0.0
        %1481 = vmatpush1.msra.mxu0 0.0
        %1482 = vmatprep.subr.mxu0 0.0
        %1483 = vmatpush1.msra.mxu0 0.0
        %1484 = vmatprep.subr.mxu0 0.0
        %1485 = vmatpush1.msra.mxu0 0.0
        %1486 = vmatprep.mubr.f32.mxu0 0.0
        %1487 = vmatmul.mubr.f32.gmra.mrb[0].mxu0 %v1416
        %v1488 = vpop.f32.mrb[0].mxu0
        %v1489 = vadd.f32 %v1163, %v1488
        %v1490 = vpop.f32.mrb[0].mxu0
        %1491 = vdwg.mxu0
        %s1492 = smul.u32 %s34, 128
        %s1493 = sadd.s32 %s1492, 14
        %s1494 = sld [smem:[#allocation2 + %s1493]]
        %s1495 = sadd.s32 %s1492, 15
        %s1496 = sld [smem:[#allocation2 + %s1495]]
        %v1497 = vmul.f32 %v1489, %v1489
        %v1498 = vmul.f32 %v1497, -12.5
        %v1499 = vmul.f32 %v1498, 1.442695
        %v1500 = vpow.pop %v1499
        %v1501 = vstv %s1494
        %v1502 = vmul.f32 %v1500, %v1501
        %v1503 = vstv %s1496
        %v1504 = vadd.f32 %v1502, %v1503
        %v1505 = vld [vmem:[%s12] sm:$0xff]
        %v1506 = vld [vmem:[%s12 + $0x8] sm:$0xff]
        %v1507 = vld [vmem:[%s12 + $0x10] sm:$0xff]
        %v1508 = vld [vmem:[%s12 + $0x18] sm:$0xff]
        %v1509 = vld [vmem:[#allocation12] sm:$0x1]
        %v1511 = vlaneseq
        %v1512 = vshrl.u32 %v1511, 7
        %v1513 = vsub.s32 0, %v1512
        %v1514 = vrot.slane %v1509, %v1513
        %v1517 = vsel %vm1092, %v1504, 0
        %1519 = vmatprep.subr.mxu0 0.0
        %1520 = vmatpush1.msra.mxu0 %v1505
        %1521 = vmatprep.subr.mxu0 0.0
        %1522 = vmatpush1.msra.mxu0 %v1506
        %1523 = vmatprep.subr.mxu0 0.0
        %1524 = vmatpush1.msra.mxu0 %v1507
        %1525 = vmatprep.subr.mxu0 0.0
        %1526 = vmatpush1.msra.mxu0 %v1508
        %1527 = vmatprep.subr.mxu0 0.0
        %1528 = vmatpush1.msra.mxu0 0.0
        %1529 = vmatprep.subr.mxu0 0.0
        %1530 = vmatpush1.msra.mxu0 0.0
        %1531 = vmatprep.subr.mxu0 0.0
        %1532 = vmatpush1.msra.mxu0 0.0
        %1533 = vmatprep.subr.mxu0 0.0
        %1534 = vmatpush1.msra.mxu0 0.0
        %1535 = vmatprep.subr.mxu0 0.0
        %1536 = vmatpush1.msra.mxu0 0.0
        %1537 = vmatprep.subr.mxu0 0.0
        %1538 = vmatpush1.msra.mxu0 0.0
        %1539 = vmatprep.subr.mxu0 0.0
        %1540 = vmatpush1.msra.mxu0 0.0
        %1541 = vmatprep.subr.mxu0 0.0
        %1542 = vmatpush1.msra.mxu0 0.0
        %1543 = vmatprep.subr.mxu0 0.0
        %1544 = vmatpush1.msra.mxu0 0.0
        %1545 = vmatprep.subr.mxu0 0.0
        %1546 = vmatpush1.msra.mxu0 0.0
        %1547 = vmatprep.subr.mxu0 0.0
        %1548 = vmatpush1.msra.mxu0 0.0
        %1549 = vmatprep.subr.mxu0 0.0
        %1550 = vmatpush1.msra.mxu0 0.0
        %1551 = vmatprep.subr.mxu0 0.0
        %1552 = vmatpush1.msra.mxu0 0.0
        %1553 = vmatprep.subr.mxu0 0.0
        %1554 = vmatpush1.msra.mxu0 0.0
        %1555 = vmatprep.subr.mxu0 0.0
        %1556 = vmatpush1.msra.mxu0 0.0
        %1557 = vmatprep.subr.mxu0 0.0
        %1558 = vmatpush1.msra.mxu0 0.0
        %1559 = vmatprep.subr.mxu0 0.0
        %1560 = vmatpush1.msra.mxu0 0.0
        %1561 = vmatprep.subr.mxu0 0.0
        %1562 = vmatpush1.msra.mxu0 0.0
        %1563 = vmatprep.subr.mxu0 0.0
        %1564 = vmatpush1.msra.mxu0 0.0
        %1565 = vmatprep.subr.mxu0 0.0
        %1566 = vmatpush1.msra.mxu0 0.0
        %1567 = vmatprep.subr.mxu0 0.0
        %1568 = vmatpush1.msra.mxu0 0.0
        %1569 = vmatprep.subr.mxu0 0.0
        %1570 = vmatpush1.msra.mxu0 0.0
        %1571 = vmatprep.subr.mxu0 0.0
        %1572 = vmatpush1.msra.mxu0 0.0
        %1573 = vmatprep.subr.mxu0 0.0
        %1574 = vmatpush1.msra.mxu0 0.0
        %1575 = vmatprep.subr.mxu0 0.0
        %1576 = vmatpush1.msra.mxu0 0.0
        %1577 = vmatprep.subr.mxu0 0.0
        %1578 = vmatpush1.msra.mxu0 0.0
        %1579 = vmatprep.subr.mxu0 0.0
        %1580 = vmatpush1.msra.mxu0 0.0
        %1581 = vmatprep.subr.mxu0 0.0
        %1582 = vmatpush1.msra.mxu0 0.0
        %1583 = vmatprep.mubr.f32.mxu0 0.0
        %1584 = vmatmul.mubr.f32.gmra.mrb[0].mxu0 %v1517
        %v1585 = vpop.f32.mrb[0].mxu0
        %v1586 = vadd.f32 %v1514, %v1585
        %v1587 = vpop.f32.mrb[0].mxu0
        %1588 = vdwg.mxu0
        %v1589 = vxor.u32 %v1586, 2147483648
        %v1590 = vmul.f32 %v1589, 1.442695
        %v1591 = vpow.pop %v1590
        %v1592 = vadd.f32 %v1591, 1.0
        %v1593 = vrcp.pop %v1592
        %v1594 = vmul.f32 1.0, %v1593
        %1596 = vset.pattern.permute.xlu0 32
        %1597 = vperm.xlu0 %1596, %v1163
        %v1598 = vpop.permute.xlu0 %1597
        %v1600 = vsel %vm652, %v1594, %v1598
        %vm1601 = vcmask 31744
        %1602 = vst.msk [vmem:[%s615] sm:$0xff] %vm1601, %v1600
        %p1603 = scmp.lt.s32.totalorder %s34, 1
        %s1604 = scalar_select %p1603, %s34, 1
        %p1605 = scmp.lt.s32.totalorder %s35, 0
        %s1606 = scalar_select %p1605, %s35, 0
        %s1607 = sadd.s32 %s1606, %s1604
        %s1608 = smul.addr %s1607, 8
        %s1609 = scalar_lea.vmem %s14, %s1608
        // Predicated region
        $region112: #{mlp_gauss_forward.1} parent=75 // pred_check
          %p1610 = pneg %p370
        $region113: #{mlp_gauss_forward.1} parent=75 // pred_check_branch
          %1612 = sbr.rel (%p1610) target = $region115
        $region114: #{mlp_gauss_forward.1} parent=75 // pred_region
          _
        $region115: #{mlp_gauss_forward.1} parent=75 // pred_fallthru
          _
      $region76: #{mlp_gauss_forward.1} parent=5 // pred_fallthru
        _
      %p1613 = scmp.le.s32.totalorder 2, %s25
      // Predicated region
      $region116: #{mlp_gauss_forward.1} parent=5 // pred_check
        %p1614 = pneg %p1613
      $region117: #{mlp_gauss_forward.1} parent=5 // pred_check_branch
        %1616 = sbr.rel (%p1614) target = $region119
      $region118: #{mlp_gauss_forward.1} parent=5 // pred_region
        %s1617 = ssub.s32 %s25, 2
        // Predicated region
        $region120: #{mlp_gauss_forward.1} parent=118 // pred_check
          %p1618 = pneg %p376
        $region121: #{mlp_gauss_forward.1} parent=118 // pred_check_branch
          %1620 = sbr.rel (%p1618) target = $region123
        $region122: #{mlp_gauss_forward.1} parent=118 // pred_region
          %p1621 = scmp.lt.s32.totalorder %s36, 1
          %s1622 = scalar_select %p1621, %s36, 1
          %p1623 = scmp.lt.s32.totalorder %s37, 0
          %s1624 = scalar_select %p1623, %s37, 0
          %s1625 = sadd.s32 %s1624, %s1622
          %s1626 = smul.addr %s1625, 8
          %s1627 = scalar_lea.vmem %s14, %s1626
        $region123: #{mlp_gauss_forward.1} parent=118 // pred_fallthru
          _
      $region119: #{mlp_gauss_forward.1} parent=5 // pred_fallthru
        _
    $region6: #{mlp_gauss_forward.1} parent=1 // loop_footer
      %s29 = sadd.s32 1, %s25
    $region7: #{mlp_gauss_forward.1} parent=1 // loop_footer_branch
      %24 = sbr.rel target = $region3
    $region8: #{mlp_gauss_forward.1} parent=1 // loop_exit
      _
    %1628 = vsyncpa [#allocation3], 1
    %s1629 = scalar_lea.sflag [#allocation3], 1
    %1630 = vsyncpa %s1629, 1
    %1631 = vsyncpa [#allocation7], 1
    %1632 = vsyncpa [#allocation10], 1
    %1633 = vsyncpa [#allocation13], 1
    %1634 = vsyncpa [#allocation4], 1
    %s1635 = scalar_lea.sflag [#allocation4], 1
    %1636 = vsyncpa %s1635, 1

</llo_original>
